<compile_context>
chip_gen: v6e
topology: v6e:2x2x1
jax: 0.10.0
libtpu: 0.0.40
codegen_flags: <defaults>
</compile_context>

<pallas_src>
import functools

import jax
import jax.numpy as jnp
from jax.experimental import pallas as pl
from jax.experimental.pallas import tpu as pltpu


def _round_up(x, m):
    return ((x + m - 1) // m) * m


def _mlp_disc_kernel(x_ref,
                     w1_ref, b1_ref,
                     w2_ref, b2_ref,
                     w3_ref, b3_ref,
                     w4_ref, b4_ref,
                     o_ref):
    """Whole 4-layer MLP + sigmoid for one batch tile, all resident in VMEM.

    Matmul inputs are in the weights' dtype (f32 or bf16); accumulation and all
    elementwise math (bias add, ReLU, sigmoid) are f32.  Only the real output
    column(s) are stored (o_ref last dim = out_dim).
    """
    dt = w1_ref.dtype
    x = x_ref[...]

    h = jnp.dot(x, w1_ref[...], preferred_element_type=jnp.float32) + b1_ref[...]
    h = jnp.maximum(h, 0.0).astype(dt)

    h = jnp.dot(h, w2_ref[...], preferred_element_type=jnp.float32) + b2_ref[...]
    h = jnp.maximum(h, 0.0).astype(dt)

    h = jnp.dot(h, w3_ref[...], preferred_element_type=jnp.float32) + b3_ref[...]
    h = jnp.maximum(h, 0.0).astype(dt)

    out_cols = o_ref.shape[1]                      # real output width (static)
    z = jnp.dot(h, w4_ref[...], preferred_element_type=jnp.float32)
    z = z[:, :out_cols] + b4_ref[...][:, :out_cols]
    o_ref[...] = jax.nn.sigmoid(z).astype(o_ref.dtype)


def prepare_discriminator_params(params, compute_dtype=jnp.bfloat16):
    """One-time pad + cast of the raw (in,out)-layout params.

    Hidden dim is padded to 128 lanes, layer-4 output columns to 128 (kept wide
    inside the kernel for a clean N=128 matmul; sliced before the store),
    layer-1 K to a full sublane group.  Weights are cast to compute_dtype;
    biases stay f32 (added to the f32 accumulator).
    Returns (prepared_params, out_dim)."""
    w1, b1, w2, b2, w3, b3, w4, b4 = params
    in_dim, hidden = w1.shape
    out_dim = w4.shape[1]

    k_mult = 16 if compute_dtype == jnp.bfloat16 else 8
    K1 = _round_up(in_dim, k_mult)
    H = _round_up(hidden, 128)
    OUT = _round_up(out_dim, 128)

    def pad2(a, rows, cols):
        return jnp.pad(a, ((0, rows - a.shape[0]), (0, cols - a.shape[1])))

    prepared = (
        pad2(w1, K1, H).astype(compute_dtype), pad2(b1, 1, H),
        pad2(w2, H, H).astype(compute_dtype),  pad2(b2, 1, H),
        pad2(w3, H, H).astype(compute_dtype),  pad2(b3, 1, H),
        pad2(w4, H, OUT).astype(compute_dtype), pad2(b4, 1, OUT),
    )
    return prepared, out_dim


@functools.partial(
    jax.jit,
    static_argnames=("out_dim", "batch_tile", "min_grid_steps", "compute_dtype"))
def discriminator_forward(x, prepared_params, *, out_dim,
                          batch_tile=2048, min_grid_steps=1,
                          compute_dtype=jnp.bfloat16):
    """x: (B, input_size) float32 -> (B, out_dim) float32.

    prepared_params comes from prepare_discriminator_params (same
    compute_dtype).  min_grid_steps=2 keeps both TensorCores busy on
    2-TC chips (v4 / v5p / v7x); 1 is best on single-TC chips (v5e / v6e)."""
    w1p, b1p, w2p, b2p, w3p, b3p, w4p, b4p = prepared_params
    B, in_dim = x.shape
    K1 = w1p.shape[0]

    # Sublane multiple for the batch tile (bf16 packs 16 rows per vreg).
    sub = 16 if compute_dtype == jnp.bfloat16 else 8

    # Pad x's feature dim to the padded layer-1 K and cast to compute dtype.
    xp = x.astype(compute_dtype)
    if K1 != in_dim:
        xp = jnp.pad(xp, ((0, 0), (0, K1 - in_dim)))

    # Batch tiling: largest tile <= batch_tile, but at least min_grid_steps
    # grid steps when the batch allows it, so multi-TC chips split the work.
    Bp = _round_up(B, sub)
    steps = max(min_grid_steps, pl.cdiv(Bp, batch_tile))
    tile = _round_up(pl.cdiv(Bp, steps), sub)
    Bp = _round_up(Bp, tile)
    if Bp != B:
        xp = jnp.pad(xp, ((0, Bp - B), (0, 0)))
    grid = (Bp // tile,)

    def rep(shape):  # replicated weights / biases: constant block index
        return pl.BlockSpec(shape, lambda i: (0, 0))

    out = pl.pallas_call(
        _mlp_disc_kernel,
        out_shape=jax.ShapeDtypeStruct((Bp, out_dim), jnp.float32),
        grid=grid,
        in_specs=[
            pl.BlockSpec((tile, K1), lambda i: (i, 0)),       # x batch tile
            rep(w1p.shape), rep(b1p.shape),
            rep(w2p.shape), rep(b2p.shape),
            rep(w3p.shape), rep(b3p.shape),
            rep(w4p.shape), rep(b4p.shape),
        ],
        # Narrow store: only the real output column(s) hit HBM.
        out_specs=pl.BlockSpec((tile, out_dim), lambda i: (i, 0)),
        compiler_params=pltpu.CompilerParams(
            dimension_semantics=("parallel",)),
    )(xp, w1p, b1p, w2p, b2p, w3p, b3p, w4p, b4p)

    return out[:B]


def _num_tensorcores_per_chip():
    """Best-effort guess of TensorCores per JAX device (2 on v4/v5p/v7x)."""
    try:
        kind = jax.devices()[0].device_kind.lower()
    except Exception:
        return 1
    for tag in ("v7", "7x", "v5p", "v4"):
        if tag in kind:
            return 2
    return 1


def init_discriminator_params(key, input_size=1, output_size=1, hidden_size=100):
    """Deterministic init mirroring torch.nn.Linear default (uniform +-1/sqrt(fan_in)).
    Weights stored as (in_features, out_features); biases as (1, out_features)."""
    dims = [(input_size, hidden_size),
            (hidden_size, hidden_size),
            (hidden_size, hidden_size),
            (hidden_size, output_size)]
    params = []
    for (fan_in, fan_out) in dims:
        key, kw, kb = jax.random.split(key, 3)
        bound = 1.0 / jnp.sqrt(jnp.float32(fan_in))
        w = jax.random.uniform(kw, (fan_in, fan_out), jnp.float32, -bound, bound)
        b = jax.random.uniform(kb, (1, fan_out), jnp.float32, -bound, bound)
        params += [w, b]
    return tuple(params)


def _reference_forward(x, params):
    w1, b1, w2, b2, w3, b3, w4, b4 = params
    h = jnp.maximum(x @ w1 + b1, 0.0)
    h = jnp.maximum(h @ w2 + b2, 0.0)
    h = jnp.maximum(h @ w3 + b3, 0.0)
    return jax.nn.sigmoid(h @ w4 + b4)


if __name__ == "__main__":
    key = jax.random.PRNGKey(0)

    # Small shapes consistent with the module (Linear stack on (batch, features)).
    batch, input_size, hidden_size, output_size = 512, 4, 100, 1

    key, kx, kp = jax.random.split(key, 3)
    x = jax.random.normal(kx, (batch, input_size), dtype=jnp.float32)
    params = init_discriminator_params(
        kp, input_size=input_size, output_size=output_size, hidden_size=hidden_size)

    ref = _reference_forward(x, params)
    min_grid = _num_tensorcores_per_chip()

    # f32 path (exact math): tight correctness check vs. pure-JAX reference.
    prep_f32, out_dim = prepare_discriminator_params(params, jnp.float32)
    out_f32 = discriminator_forward(x, prep_f32, out_dim=out_dim,
                                    min_grid_steps=min_grid,
                                    compute_dtype=jnp.float32)
    out_f32 = jax.block_until_ready(out_f32)
    assert out_f32.shape == (batch, output_size)
    assert jnp.allclose(out_f32, ref, atol=1e-5, rtol=1e-5), "f32 mismatch vs reference"

    # bf16 matmul inputs (default fast path), f32 accumulation: loose check.
    prep_bf16, out_dim = prepare_discriminator_params(params, jnp.bfloat16)
    out_bf16 = discriminator_forward(x, prep_bf16, out_dim=out_dim,
                                     min_grid_steps=min_grid,
                                     compute_dtype=jnp.bfloat16)
    out_bf16 = jax.block_until_ready(out_bf16)
    assert out_bf16.shape == (batch, output_size)
    assert jnp.allclose(out_bf16, ref, atol=1e-1), "bf16 mismatch vs reference"

    print("KERNEL_OK")
</pallas_src>

<mosaic_0001>
module attributes {stable_mosaic.version = 11 : i64} {
  func.func @_mlp_disc_kernel(%arg0: i32, %arg1: memref<512x8xf32, #tpu.memory_space<vmem>>, %arg2: memref<8x128xf32, #tpu.memory_space<vmem>>, %arg3: memref<1x128xf32, #tpu.memory_space<vmem>>, %arg4: memref<128x128xf32, #tpu.memory_space<vmem>>, %arg5: memref<1x128xf32, #tpu.memory_space<vmem>>, %arg6: memref<128x128xf32, #tpu.memory_space<vmem>>, %arg7: memref<1x128xf32, #tpu.memory_space<vmem>>, %arg8: memref<128x128xf32, #tpu.memory_space<vmem>>, %arg9: memref<1x128xf32, #tpu.memory_space<vmem>>, %arg10: memref<512x1xf32, #tpu.memory_space<vmem>>) attributes {dimension_semantics = [#tpu.dimension_semantics<parallel>], iteration_bounds = array<i64: 1>, scalar_prefetch = 0 : i64, scratch_operands = 0 : i64, tpu.core_type = #tpu.core_type<tc>, window_params = [{transform_indices = @transform_0, window_bounds = array<i64: 512, 8>}, {pipeline_mode = #tpu.pipeline_mode<synchronous>, transform_indices = @transform_1, window_bounds = array<i64: 8, 128>}, {pipeline_mode = #tpu.pipeline_mode<synchronous>, transform_indices = @transform_2, window_bounds = array<i64: 1, 128>}, {pipeline_mode = #tpu.pipeline_mode<synchronous>, transform_indices = @transform_3, window_bounds = array<i64: 128, 128>}, {pipeline_mode = #tpu.pipeline_mode<synchronous>, transform_indices = @transform_4, window_bounds = array<i64: 1, 128>}, {pipeline_mode = #tpu.pipeline_mode<synchronous>, transform_indices = @transform_5, window_bounds = array<i64: 128, 128>}, {pipeline_mode = #tpu.pipeline_mode<synchronous>, transform_indices = @transform_6, window_bounds = array<i64: 1, 128>}, {pipeline_mode = #tpu.pipeline_mode<synchronous>, transform_indices = @transform_7, window_bounds = array<i64: 128, 128>}, {pipeline_mode = #tpu.pipeline_mode<synchronous>, transform_indices = @transform_8, window_bounds = array<i64: 1, 128>}, {transform_indices = @transform_9, window_bounds = array<i64: 512, 1>}]} {
    %c0 = arith.constant 0 : index
    %c0_0 = arith.constant 0 : index
    %0 = vector.load %arg1[%c0, %c0_0] : memref<512x8xf32, #tpu.memory_space<vmem>>, vector<512x8xf32>
    %c0_1 = arith.constant 0 : index
    %c0_2 = arith.constant 0 : index
    %1 = vector.load %arg2[%c0_1, %c0_2] : memref<8x128xf32, #tpu.memory_space<vmem>>, vector<8x128xf32>
    %cst = arith.constant dense<0.000000e+00> : vector<512x128xf32>
    %2 = tpu.matmul %0, %1, %cst {dimension_numbers = #tpu.dot_dimension_numbers<[1], [0], [0], [1], [0, 0, 1, 1], [], []>} : vector<512x8xf32>, vector<8x128xf32>, vector<512x128xf32> -> vector<512x128xf32>
    %c0_3 = arith.constant 0 : index
    %c0_4 = arith.constant 0 : index
    %3 = vector.load %arg3[%c0_3, %c0_4] : memref<1x128xf32, #tpu.memory_space<vmem>>, vector<1x128xf32>
    %4 = vector.broadcast %3 : vector<1x128xf32> to vector<512x128xf32>
    %5 = arith.addf %2, %4 : vector<512x128xf32>
    %cst_5 = arith.constant 0.000000e+00 : f32
    %6 = vector.broadcast %cst_5 : f32 to vector<512x128xf32>
    %7 = arith.maximumf %5, %6 : vector<512x128xf32>
    %c0_6 = arith.constant 0 : index
    %c0_7 = arith.constant 0 : index
    %8 = vector.load %arg4[%c0_6, %c0_7] : memref<128x128xf32, #tpu.memory_space<vmem>>, vector<128x128xf32>
    %cst_8 = arith.constant dense<0.000000e+00> : vector<512x128xf32>
    %9 = tpu.matmul %7, %8, %cst_8 {dimension_numbers = #tpu.dot_dimension_numbers<[1], [0], [0], [1], [0, 0, 1, 1], [], []>} : vector<512x128xf32>, vector<128x128xf32>, vector<512x128xf32> -> vector<512x128xf32>
    %c0_9 = arith.constant 0 : index
    %c0_10 = arith.constant 0 : index
    %10 = vector.load %arg5[%c0_9, %c0_10] : memref<1x128xf32, #tpu.memory_space<vmem>>, vector<1x128xf32>
    %11 = vector.broadcast %10 : vector<1x128xf32> to vector<512x128xf32>
    %12 = arith.addf %9, %11 : vector<512x128xf32>
    %cst_11 = arith.constant 0.000000e+00 : f32
    %13 = vector.broadcast %cst_11 : f32 to vector<512x128xf32>
    %14 = arith.maximumf %12, %13 : vector<512x128xf32>
    %c0_12 = arith.constant 0 : index
    %c0_13 = arith.constant 0 : index
    %15 = vector.load %arg6[%c0_12, %c0_13] : memref<128x128xf32, #tpu.memory_space<vmem>>, vector<128x128xf32>
    %cst_14 = arith.constant dense<0.000000e+00> : vector<512x128xf32>
    %16 = tpu.matmul %14, %15, %cst_14 {dimension_numbers = #tpu.dot_dimension_numbers<[1], [0], [0], [1], [0, 0, 1, 1], [], []>} : vector<512x128xf32>, vector<128x128xf32>, vector<512x128xf32> -> vector<512x128xf32>
    %c0_15 = arith.constant 0 : index
    %c0_16 = arith.constant 0 : index
    %17 = vector.load %arg7[%c0_15, %c0_16] : memref<1x128xf32, #tpu.memory_space<vmem>>, vector<1x128xf32>
    %18 = vector.broadcast %17 : vector<1x128xf32> to vector<512x128xf32>
    %19 = arith.addf %16, %18 : vector<512x128xf32>
    %cst_17 = arith.constant 0.000000e+00 : f32
    %20 = vector.broadcast %cst_17 : f32 to vector<512x128xf32>
    %21 = arith.maximumf %19, %20 : vector<512x128xf32>
    %c0_18 = arith.constant 0 : index
    %c0_19 = arith.constant 0 : index
    %22 = vector.load %arg8[%c0_18, %c0_19] : memref<128x128xf32, #tpu.memory_space<vmem>>, vector<128x128xf32>
    %cst_20 = arith.constant dense<0.000000e+00> : vector<512x128xf32>
    %23 = tpu.matmul %21, %22, %cst_20 {dimension_numbers = #tpu.dot_dimension_numbers<[1], [0], [0], [1], [0, 0, 1, 1], [], []>} : vector<512x128xf32>, vector<128x128xf32>, vector<512x128xf32> -> vector<512x128xf32>
    %24 = vector.extract_strided_slice %23 {offsets = [0, 0], sizes = [512, 1], strides = [1, 1]} : vector<512x128xf32> to vector<512x1xf32>
    %c0_21 = arith.constant 0 : index
    %c0_22 = arith.constant 0 : index
    %25 = vector.load %arg9[%c0_21, %c0_22] : memref<1x128xf32, #tpu.memory_space<vmem>>, vector<1x128xf32>
    %26 = vector.extract_strided_slice %25 {offsets = [0, 0], sizes = [1, 1], strides = [1, 1]} : vector<1x128xf32> to vector<1x1xf32>
    %27 = vector.broadcast %26 : vector<1x1xf32> to vector<512x1xf32>
    %28 = arith.addf %24, %27 : vector<512x1xf32>
    %29 = arith.negf %28 : vector<512x1xf32>
    %30 = math.exp %29 : vector<512x1xf32>
    %cst_23 = arith.constant 1.000000e+00 : f32
    %31 = vector.broadcast %cst_23 : f32 to vector<512x1xf32>
    %32 = arith.addf %31, %30 : vector<512x1xf32>
    %33 = arith.divf %31, %32 : vector<512x1xf32>
    %c0_24 = arith.constant 0 : index
    %c0_25 = arith.constant 0 : index
    %34 = vector.load %arg10[%c0_24, %c0_25] : memref<512x1xf32, #tpu.memory_space<vmem>>, vector<512x1xf32>
    tpu.vector_store %arg10[%c0_24, %c0_25], %33 {strides = array<i32>} : memref<512x1xf32, #tpu.memory_space<vmem>>, vector<512x1xf32>,
    return
  }
  func.func @transform_0(%arg0: i32) -> (i32, i32) {
    %c0_i32 = arith.constant 0 : i32
    %c0_i32_0 = arith.constant 0 : i32
    return %arg0, %c0_i32 : i32, i32
  }
  func.func @transform_1(%arg0: i32) -> (i32, i32) {
    %c0_i32 = arith.constant 0 : i32
    %c0_i32_0 = arith.constant 0 : i32
    %c0_i32_1 = arith.constant 0 : i32
    return %c0_i32, %c0_i32_0 : i32, i32
  }
  func.func @transform_2(%arg0: i32) -> (i32, i32) {
    %c0_i32 = arith.constant 0 : i32
    %c0_i32_0 = arith.constant 0 : i32
    %c0_i32_1 = arith.constant 0 : i32
    return %c0_i32, %c0_i32_0 : i32, i32
  }
  func.func @transform_3(%arg0: i32) -> (i32, i32) {
    %c0_i32 = arith.constant 0 : i32
    %c0_i32_0 = arith.constant 0 : i32
    %c0_i32_1 = arith.constant 0 : i32
    return %c0_i32, %c0_i32_0 : i32, i32
  }
  func.func @transform_4(%arg0: i32) -> (i32, i32) {
    %c0_i32 = arith.constant 0 : i32
    %c0_i32_0 = arith.constant 0 : i32
    %c0_i32_1 = arith.constant 0 : i32
    return %c0_i32, %c0_i32_0 : i32, i32
  }
  func.func @transform_5(%arg0: i32) -> (i32, i32) {
    %c0_i32 = arith.constant 0 : i32
    %c0_i32_0 = arith.constant 0 : i32
    %c0_i32_1 = arith.constant 0 : i32
    return %c0_i32, %c0_i32_0 : i32, i32
  }
  func.func @transform_6(%arg0: i32) -> (i32, i32) {
    %c0_i32 = arith.constant 0 : i32
    %c0_i32_0 = arith.constant 0 : i32
    %c0_i32_1 = arith.constant 0 : i32
    return %c0_i32, %c0_i32_0 : i32, i32
  }
  func.func @transform_7(%arg0: i32) -> (i32, i32) {
    %c0_i32 = arith.constant 0 : i32
    %c0_i32_0 = arith.constant 0 : i32
    %c0_i32_1 = arith.constant 0 : i32
    return %c0_i32, %c0_i32_0 : i32, i32
  }
  func.func @transform_8(%arg0: i32) -> (i32, i32) {
    %c0_i32 = arith.constant 0 : i32
    %c0_i32_0 = arith.constant 0 : i32
    %c0_i32_1 = arith.constant 0 : i32
    return %c0_i32, %c0_i32_0 : i32, i32
  }
  func.func @transform_9(%arg0: i32) -> (i32, i32) {
    %c0_i32 = arith.constant 0 : i32
    %c0_i32_0 = arith.constant 0 : i32
    return %arg0, %c0_i32 : i32, i32
  }
}

</mosaic_0001>

<llo_original>
// kernel: discriminator_forward.1
$region0: #{discriminator_forward.1}
  #allocation0 [shape = 'u32[]', space=smem, size = 0x4, offset = 0x4, fixed_abs, tag = 'smem constant byte address 0x4 - core index']
  #allocation1 [shape = 'u32[144,128]{1,0:T(1,128)}', space=vmem, size = 0x12000, scoped, tag = 'internal scratch']
  %s0 = inlined_call_operand.vmem [shape: f32[512,8], index: 0, kind: input, shape index: {}]
  %s1 = inlined_call_operand.vmem [shape: f32[8,128], index: 1, kind: input, shape index: {}]
  %s2 = inlined_call_operand.vmem [shape: f32[1,128], index: 2, kind: input, shape index: {}]
  %s3 = inlined_call_operand.vmem [shape: f32[128,128], index: 3, kind: input, shape index: {}]
  %s4 = inlined_call_operand.vmem [shape: f32[1,128], index: 4, kind: input, shape index: {}]
  %s5 = inlined_call_operand.vmem [shape: f32[128,128], index: 5, kind: input, shape index: {}]
  %s6 = inlined_call_operand.vmem [shape: f32[1,128], index: 6, kind: input, shape index: {}]
  %s7 = inlined_call_operand.vmem [shape: f32[128,128], index: 7, kind: input, shape index: {}]
  %s8 = inlined_call_operand.vmem [shape: f32[1,128], index: 8, kind: input, shape index: {}]
  %s9 = inlined_call_operand.vmem [shape: f32[512,1], index: 9, kind: output, shape index: {}]
  %s10 = sld [smem:[#allocation0]]
  $region46: #{discriminator_forward.1} parent=0
    _
  %s12 = ssub.s32 1, %s10
  %s13 = scalar_select 0, %s12, %s10
  // Predicated region
  $region2: #{discriminator_forward.1} parent=0 // pred_check
    _
  $region3: #{discriminator_forward.1} parent=0 // pred_check_branch
    %15 = sbr.rel (0) target = $region5
  $region4: #{discriminator_forward.1} parent=0 // pred_region
    _
  $region5: #{discriminator_forward.1} parent=0 // pred_fallthru
    _
  // Predicated region
  $region6: #{discriminator_forward.1} parent=0 // pred_check
    _
  $region7: #{discriminator_forward.1} parent=0 // pred_check_branch
    %17 = sbr.rel (0) target = $region9
  $region8: #{discriminator_forward.1} parent=0 // pred_region
    _
  $region9: #{discriminator_forward.1} parent=0 // pred_fallthru
    _
  // Predicated region
  $region10: #{discriminator_forward.1} parent=0 // pred_check
    _
  $region11: #{discriminator_forward.1} parent=0 // pred_check_branch
    %19 = sbr.rel (0) target = $region13
  $region12: #{discriminator_forward.1} parent=0 // pred_region
    _
  $region13: #{discriminator_forward.1} parent=0 // pred_fallthru
    _
  // Predicated region
  $region14: #{discriminator_forward.1} parent=0 // pred_check
    _
  $region15: #{discriminator_forward.1} parent=0 // pred_check_branch
    %21 = sbr.rel (0) target = $region17
  $region16: #{discriminator_forward.1} parent=0 // pred_region
    _
  $region17: #{discriminator_forward.1} parent=0 // pred_fallthru
    _
  // Predicated region
  $region18: #{discriminator_forward.1} parent=0 // pred_check
    _
  $region19: #{discriminator_forward.1} parent=0 // pred_check_branch
    %23 = sbr.rel (0) target = $region21
  $region20: #{discriminator_forward.1} parent=0 // pred_region
    _
  $region21: #{discriminator_forward.1} parent=0 // pred_fallthru
    _
  // Predicated region
  $region22: #{discriminator_forward.1} parent=0 // pred_check
    _
  $region23: #{discriminator_forward.1} parent=0 // pred_check_branch
    %25 = sbr.rel (0) target = $region25
  $region24: #{discriminator_forward.1} parent=0 // pred_region
    _
  $region25: #{discriminator_forward.1} parent=0 // pred_fallthru
    _
  // Predicated region
  $region26: #{discriminator_forward.1} parent=0 // pred_check
    _
  $region27: #{discriminator_forward.1} parent=0 // pred_check_branch
    %27 = sbr.rel (0) target = $region29
  $region28: #{discriminator_forward.1} parent=0 // pred_region
    _
  $region29: #{discriminator_forward.1} parent=0 // pred_fallthru
    _
  // Predicated region
  $region30: #{discriminator_forward.1} parent=0 // pred_check
    _
  $region31: #{discriminator_forward.1} parent=0 // pred_check_branch
    %29 = sbr.rel (0) target = $region33
  $region32: #{discriminator_forward.1} parent=0 // pred_region
    _
  $region33: #{discriminator_forward.1} parent=0 // pred_fallthru
    _
  // Predicated region
  $region34: #{discriminator_forward.1} parent=0 // pred_check
    _
  $region35: #{discriminator_forward.1} parent=0 // pred_check_branch
    %31 = sbr.rel (0) target = $region37
  $region36: #{discriminator_forward.1} parent=0 // pred_region
    _
  $region37: #{discriminator_forward.1} parent=0 // pred_fallthru
    _
  %v32 = vld [vmem:[%s0] sm:$0xff]
  %v33 = vld [vmem:[%s0 + $0x8] sm:$0xff]
  %v34 = vld [vmem:[%s0 + $0x10] sm:$0xff]
  %v35 = vld [vmem:[%s0 + $0x18] sm:$0xff]
  %v36 = vld [vmem:[%s0 + $0x20] sm:$0xff]
  %v37 = vld [vmem:[%s0 + $0x28] sm:$0xff]
  %v38 = vld [vmem:[%s0 + $0x30] sm:$0xff]
  %v39 = vld [vmem:[%s0 + $0x38] sm:$0xff]
  %v40 = vld [vmem:[%s0 + $0x40] sm:$0xff]
  %v41 = vld [vmem:[%s0 + $0x48] sm:$0xff]
  %v42 = vld [vmem:[%s0 + $0x50] sm:$0xff]
  %v43 = vld [vmem:[%s0 + $0x58] sm:$0xff]
  %v44 = vld [vmem:[%s0 + $0x60] sm:$0xff]
  %v45 = vld [vmem:[%s0 + $0x68] sm:$0xff]
  %v46 = vld [vmem:[%s0 + $0x70] sm:$0xff]
  %v47 = vld [vmem:[%s0 + $0x78] sm:$0xff]
  %v48 = vld [vmem:[%s0 + $0x80] sm:$0xff]
  %v49 = vld [vmem:[%s0 + $0x88] sm:$0xff]
  %v50 = vld [vmem:[%s0 + $0x90] sm:$0xff]
  %v51 = vld [vmem:[%s0 + $0x98] sm:$0xff]
  %v52 = vld [vmem:[%s0 + $0xa0] sm:$0xff]
  %v53 = vld [vmem:[%s0 + $0xa8] sm:$0xff]
  %v54 = vld [vmem:[%s0 + $0xb0] sm:$0xff]
  %v55 = vld [vmem:[%s0 + $0xb8] sm:$0xff]
  %v56 = vld [vmem:[%s0 + $0xc0] sm:$0xff]
  %v57 = vld [vmem:[%s0 + $0xc8] sm:$0xff]
  %v58 = vld [vmem:[%s0 + $0xd0] sm:$0xff]
  %v59 = vld [vmem:[%s0 + $0xd8] sm:$0xff]
  %v60 = vld [vmem:[%s0 + $0xe0] sm:$0xff]
  %v61 = vld [vmem:[%s0 + $0xe8] sm:$0xff]
  %v62 = vld [vmem:[%s0 + $0xf0] sm:$0xff]
  %v63 = vld [vmem:[%s0 + $0xf8] sm:$0xff]
  %v64 = vld [vmem:[%s0 + $0x100] sm:$0xff]
  %v65 = vld [vmem:[%s0 + $0x108] sm:$0xff]
  %v66 = vld [vmem:[%s0 + $0x110] sm:$0xff]
  %v67 = vld [vmem:[%s0 + $0x118] sm:$0xff]
  %v68 = vld [vmem:[%s0 + $0x120] sm:$0xff]
  %v69 = vld [vmem:[%s0 + $0x128] sm:$0xff]
  %v70 = vld [vmem:[%s0 + $0x130] sm:$0xff]
  %v71 = vld [vmem:[%s0 + $0x138] sm:$0xff]
  %v72 = vld [vmem:[%s0 + $0x140] sm:$0xff]
  %v73 = vld [vmem:[%s0 + $0x148] sm:$0xff]
  %v74 = vld [vmem:[%s0 + $0x150] sm:$0xff]
  %v75 = vld [vmem:[%s0 + $0x158] sm:$0xff]
  %v76 = vld [vmem:[%s0 + $0x160] sm:$0xff]
  %v77 = vld [vmem:[%s0 + $0x168] sm:$0xff]
  %v78 = vld [vmem:[%s0 + $0x170] sm:$0xff]
  %v79 = vld [vmem:[%s0 + $0x178] sm:$0xff]
  %v80 = vld [vmem:[%s0 + $0x180] sm:$0xff]
  %v81 = vld [vmem:[%s0 + $0x188] sm:$0xff]
  %v82 = vld [vmem:[%s0 + $0x190] sm:$0xff]
  %v83 = vld [vmem:[%s0 + $0x198] sm:$0xff]
  %v84 = vld [vmem:[%s0 + $0x1a0] sm:$0xff]
  %v85 = vld [vmem:[%s0 + $0x1a8] sm:$0xff]
  %v86 = vld [vmem:[%s0 + $0x1b0] sm:$0xff]
  %v87 = vld [vmem:[%s0 + $0x1b8] sm:$0xff]
  %v88 = vld [vmem:[%s0 + $0x1c0] sm:$0xff]
  %v89 = vld [vmem:[%s0 + $0x1c8] sm:$0xff]
  %v90 = vld [vmem:[%s0 + $0x1d0] sm:$0xff]
  %v91 = vld [vmem:[%s0 + $0x1d8] sm:$0xff]
  %v92 = vld [vmem:[%s0 + $0x1e0] sm:$0xff]
  %v93 = vld [vmem:[%s0 + $0x1e8] sm:$0xff]
  %v94 = vld [vmem:[%s0 + $0x1f0] sm:$0xff]
  %v95 = vld [vmem:[%s0 + $0x1f8] sm:$0xff]
  %v96 = vld [vmem:[%s1] sm:$0xff]
  %v97 = vld [vmem:[%s2] sm:$0x1]
  %v99 = vlaneseq
  %v100 = vshrl.u32 %v99, 7
  %v101 = vsub.s32 0, %v100
  %v102 = vrot.slane %v97, %v101
  %vm104 = vcmask 64512
  %v106 = vsel %vm104, %v32, 0
  %v109 = vsel %vm104, %v33, 0
  %v112 = vsel %vm104, %v34, 0
  %v115 = vsel %vm104, %v35, 0
  %v118 = vsel %vm104, %v36, 0
  %v121 = vsel %vm104, %v37, 0
  %v124 = vsel %vm104, %v38, 0
  %v127 = vsel %vm104, %v39, 0
  %v130 = vsel %vm104, %v40, 0
  %v133 = vsel %vm104, %v41, 0
  %v136 = vsel %vm104, %v42, 0
  %v139 = vsel %vm104, %v43, 0
  %v142 = vsel %vm104, %v44, 0
  %v145 = vsel %vm104, %v45, 0
  %v148 = vsel %vm104, %v46, 0
  %v151 = vsel %vm104, %v47, 0
  %v154 = vsel %vm104, %v48, 0
  %v157 = vsel %vm104, %v49, 0
  %v160 = vsel %vm104, %v50, 0
  %v163 = vsel %vm104, %v51, 0
  %v166 = vsel %vm104, %v52, 0
  %v169 = vsel %vm104, %v53, 0
  %v172 = vsel %vm104, %v54, 0
  %v175 = vsel %vm104, %v55, 0
  %v178 = vsel %vm104, %v56, 0
  %v181 = vsel %vm104, %v57, 0
  %v184 = vsel %vm104, %v58, 0
  %v187 = vsel %vm104, %v59, 0
  %v190 = vsel %vm104, %v60, 0
  %v193 = vsel %vm104, %v61, 0
  %v196 = vsel %vm104, %v62, 0
  %v199 = vsel %vm104, %v63, 0
  %v202 = vsel %vm104, %v64, 0
  %v205 = vsel %vm104, %v65, 0
  %v208 = vsel %vm104, %v66, 0
  %v211 = vsel %vm104, %v67, 0
  %v214 = vsel %vm104, %v68, 0
  %v217 = vsel %vm104, %v69, 0
  %v220 = vsel %vm104, %v70, 0
  %v223 = vsel %vm104, %v71, 0
  %v226 = vsel %vm104, %v72, 0
  %v229 = vsel %vm104, %v73, 0
  %v232 = vsel %vm104, %v74, 0
  %v235 = vsel %vm104, %v75, 0
  %v238 = vsel %vm104, %v76, 0
  %v241 = vsel %vm104, %v77, 0
  %v244 = vsel %vm104, %v78, 0
  %v247 = vsel %vm104, %v79, 0
  %v250 = vsel %vm104, %v80, 0
  %v253 = vsel %vm104, %v81, 0
  %v256 = vsel %vm104, %v82, 0
  %v259 = vsel %vm104, %v83, 0
  %v262 = vsel %vm104, %v84, 0
  %v265 = vsel %vm104, %v85, 0
  %v268 = vsel %vm104, %v86, 0
  %v271 = vsel %vm104, %v87, 0
  %v274 = vsel %vm104, %v88, 0
  %v277 = vsel %vm104, %v89, 0
  %v280 = vsel %vm104, %v90, 0
  %v283 = vsel %vm104, %v91, 0
  %v286 = vsel %vm104, %v92, 0
  %v289 = vsel %vm104, %v93, 0
  %v292 = vsel %vm104, %v94, 0
  %v295 = vsel %vm104, %v95, 0
  %297 = vmatprep.subr.mxu0 0.0
  %298 = vmatpush1.msra.mxu0 0.0
  %299 = vmatprep.subr.mxu0 0.0
  %300 = vmatpush1.msra.mxu0 0.0
  %301 = vmatprep.subr.mxu0 0.0
  %302 = vmatpush1.msra.mxu0 0.0
  %303 = vmatprep.subr.mxu0 0.0
  %304 = vmatpush1.msra.mxu0 0.0
  %305 = vmatprep.subr.mxu0 0.0
  %306 = vmatpush1.msra.mxu0 0.0
  %307 = vmatprep.subr.mxu0 0.0
  %308 = vmatpush1.msra.mxu0 0.0
  %309 = vmatprep.subr.mxu0 0.0
  %310 = vmatpush1.msra.mxu0 0.0
  %311 = vmatprep.subr.mxu0 0.0
  %312 = vmatpush1.msra.mxu0 0.0
  %313 = vmatprep.subr.mxu0 0.0
  %314 = vmatpush1.msra.mxu0 0.0
  %315 = vmatprep.subr.mxu0 0.0
  %316 = vmatpush1.msra.mxu0 0.0
  %317 = vmatprep.subr.mxu0 0.0
  %318 = vmatpush1.msra.mxu0 0.0
  %319 = vmatprep.subr.mxu0 0.0
  %320 = vmatpush1.msra.mxu0 0.0
  %321 = vmatprep.subr.mxu0 0.0
  %322 = vmatpush1.msra.mxu0 0.0
  %323 = vmatprep.subr.mxu0 0.0
  %324 = vmatpush1.msra.mxu0 0.0
  %325 = vmatprep.subr.mxu0 0.0
  %326 = vmatpush1.msra.mxu0 0.0
  %327 = vmatprep.subr.mxu0 0.0
  %328 = vmatpush1.msra.mxu0 %v96
  %329 = vmatprep.subr.mxu0 0.0
  %330 = vmatpush2.msra.mxu0 0.0
  %331 = vmatprep.subr.mxu0 0.0
  %332 = vmatpush2.msra.mxu0 0.0
  %333 = vmatprep.subr.mxu0 0.0
  %334 = vmatpush2.msra.mxu0 0.0
  %335 = vmatprep.subr.mxu0 0.0
  %336 = vmatpush2.msra.mxu0 0.0
  %337 = vmatprep.subr.mxu0 0.0
  %338 = vmatpush2.msra.mxu0 0.0
  %339 = vmatprep.subr.mxu0 0.0
  %340 = vmatpush2.msra.mxu0 0.0
  %341 = vmatprep.subr.mxu0 0.0
  %342 = vmatpush2.msra.mxu0 0.0
  %343 = vmatprep.subr.mxu0 0.0
  %344 = vmatpush2.msra.mxu0 0.0
  %345 = vmatprep.subr.mxu0 0.0
  %346 = vmatpush2.msra.mxu0 0.0
  %347 = vmatprep.subr.mxu0 0.0
  %348 = vmatpush2.msra.mxu0 0.0
  %349 = vmatprep.subr.mxu0 0.0
  %350 = vmatpush2.msra.mxu0 0.0
  %351 = vmatprep.subr.mxu0 0.0
  %352 = vmatpush2.msra.mxu0 0.0
  %353 = vmatprep.subr.mxu0 0.0
  %354 = vmatpush2.msra.mxu0 0.0
  %355 = vmatprep.subr.mxu0 0.0
  %356 = vmatpush2.msra.mxu0 0.0
  %357 = vmatprep.subr.mxu0 0.0
  %358 = vmatpush2.msra.mxu0 0.0
  %359 = vmatprep.subr.mxu0 0.0
  %360 = vmatpush2.msra.mxu0 0.0
  %361 = vmatprep.mubr.f32.mxu0 0.0
  %362 = vmatmul.mubr.f32.gmra.mxu0 %v106
  %v363 = vpop.f32.mrf.mxu0
  %v364 = vadd.f32 %v102, %v363
  %v365 = vpop.f32.mrf.mxu0
  %366 = vmatprep.mubr.f32.mxu0 0.0
  %367 = vmatmul.mubr.f32.gmra.mxu0 %v109
  %v368 = vpop.f32.mrf.mxu0
  %v369 = vadd.f32 %v102, %v368
  %v370 = vpop.f32.mrf.mxu0
  %371 = vmatprep.mubr.f32.mxu0 0.0
  %372 = vmatmul.mubr.f32.gmra.mxu0 %v112
  %v373 = vpop.f32.mrf.mxu0
  %v374 = vadd.f32 %v102, %v373
  %v375 = vpop.f32.mrf.mxu0
  %376 = vmatprep.mubr.f32.mxu0 0.0
  %377 = vmatmul.mubr.f32.gmra.mxu0 %v115
  %v378 = vpop.f32.mrf.mxu0
  %v379 = vadd.f32 %v102, %v378
  %v380 = vpop.f32.mrf.mxu0
  %381 = vmatprep.mubr.f32.mxu0 0.0
  %382 = vmatmul.mubr.f32.gmra.mxu0 %v118
  %v383 = vpop.f32.mrf.mxu0
  %v384 = vadd.f32 %v102, %v383
  %v385 = vpop.f32.mrf.mxu0
  %386 = vmatprep.mubr.f32.mxu0 0.0
  %387 = vmatmul.mubr.f32.gmra.mxu0 %v121
  %v388 = vpop.f32.mrf.mxu0
  %v389 = vadd.f32 %v102, %v388
  %v390 = vpop.f32.mrf.mxu0
  %391 = vmatprep.mubr.f32.mxu0 0.0
  %392 = vmatmul.mubr.f32.gmra.mxu0 %v124
  %v393 = vpop.f32.mrf.mxu0
  %v394 = vadd.f32 %v102, %v393
  %v395 = vpop.f32.mrf.mxu0
  %396 = vmatprep.mubr.f32.mxu0 0.0
  %397 = vmatmul.mubr.f32.gmra.mxu0 %v127
  %v398 = vpop.f32.mrf.mxu0
  %v399 = vadd.f32 %v102, %v398
  %v400 = vpop.f32.mrf.mxu0
  %401 = vmatprep.mubr.f32.mxu0 0.0
  %402 = vmatmul.mubr.f32.gmra.mxu0 %v130
  %v403 = vpop.f32.mrf.mxu0
  %v404 = vadd.f32 %v102, %v403
  %v405 = vpop.f32.mrf.mxu0
  %406 = vmatprep.mubr.f32.mxu0 0.0
  %407 = vmatmul.mubr.f32.gmra.mxu0 %v133
  %v408 = vpop.f32.mrf.mxu0
  %v409 = vadd.f32 %v102, %v408
  %v410 = vpop.f32.mrf.mxu0
  %411 = vmatprep.mubr.f32.mxu0 0.0
  %412 = vmatmul.mubr.f32.gmra.mxu0 %v136
  %v413 = vpop.f32.mrf.mxu0
  %v414 = vadd.f32 %v102, %v413
  %v415 = vpop.f32.mrf.mxu0
  %416 = vmatprep.mubr.f32.mxu0 0.0
  %417 = vmatmul.mubr.f32.gmra.mxu0 %v139
  %v418 = vpop.f32.mrf.mxu0
  %v419 = vadd.f32 %v102, %v418
  %v420 = vpop.f32.mrf.mxu0
  %421 = vmatprep.mubr.f32.mxu0 0.0
  %422 = vmatmul.mubr.f32.gmra.mxu0 %v142
  %v423 = vpop.f32.mrf.mxu0
  %v424 = vadd.f32 %v102, %v423
  %v425 = vpop.f32.mrf.mxu0
  %426 = vmatprep.mubr.f32.mxu0 0.0
  %427 = vmatmul.mubr.f32.gmra.mxu0 %v145
  %v428 = vpop.f32.mrf.mxu0
  %v429 = vadd.f32 %v102, %v428
  %v430 = vpop.f32.mrf.mxu0
  %431 = vmatprep.mubr.f32.mxu0 0.0
  %432 = vmatmul.mubr.f32.gmra.mxu0 %v148
  %v433 = vpop.f32.mrf.mxu0
  %v434 = vadd.f32 %v102, %v433
  %v435 = vpop.f32.mrf.mxu0
  %436 = vmatprep.mubr.f32.mxu0 0.0
  %437 = vmatmul.mubr.f32.gmra.mxu0 %v151
  %v438 = vpop.f32.mrf.mxu0
  %v439 = vadd.f32 %v102, %v438
  %v440 = vpop.f32.mrf.mxu0
  %441 = vmatprep.mubr.f32.mxu0 0.0
  %442 = vmatmul.mubr.f32.gmra.mxu0 %v154
  %v443 = vpop.f32.mrf.mxu0
  %v444 = vadd.f32 %v102, %v443
  %v445 = vpop.f32.mrf.mxu0
  %446 = vmatprep.mubr.f32.mxu0 0.0
  %447 = vmatmul.mubr.f32.gmra.mxu0 %v157
  %v448 = vpop.f32.mrf.mxu0
  %v449 = vadd.f32 %v102, %v448
  %v450 = vpop.f32.mrf.mxu0
  %451 = vmatprep.mubr.f32.mxu0 0.0
  %452 = vmatmul.mubr.f32.gmra.mxu0 %v160
  %v453 = vpop.f32.mrf.mxu0
  %v454 = vadd.f32 %v102, %v453
  %v455 = vpop.f32.mrf.mxu0
  %456 = vmatprep.mubr.f32.mxu0 0.0
  %457 = vmatmul.mubr.f32.gmra.mxu0 %v163
  %v458 = vpop.f32.mrf.mxu0
  %v459 = vadd.f32 %v102, %v458
  %v460 = vpop.f32.mrf.mxu0
  %461 = vmatprep.mubr.f32.mxu0 0.0
  %462 = vmatmul.mubr.f32.gmra.mxu0 %v166
  %v463 = vpop.f32.mrf.mxu0
  %v464 = vadd.f32 %v102, %v463
  %v465 = vpop.f32.mrf.mxu0
  %466 = vmatprep.mubr.f32.mxu0 0.0
  %467 = vmatmul.mubr.f32.gmra.mxu0 %v169
  %v468 = vpop.f32.mrf.mxu0
  %v469 = vadd.f32 %v102, %v468
  %v470 = vpop.f32.mrf.mxu0
  %471 = vmatprep.mubr.f32.mxu0 0.0
  %472 = vmatmul.mubr.f32.gmra.mxu0 %v172
  %v473 = vpop.f32.mrf.mxu0
  %v474 = vadd.f32 %v102, %v473
  %v475 = vpop.f32.mrf.mxu0
  %476 = vmatprep.mubr.f32.mxu0 0.0
  %477 = vmatmul.mubr.f32.gmra.mxu0 %v175
  %v478 = vpop.f32.mrf.mxu0
  %v479 = vadd.f32 %v102, %v478
  %v480 = vpop.f32.mrf.mxu0
  %481 = vmatprep.mubr.f32.mxu0 0.0
  %482 = vmatmul.mubr.f32.gmra.mxu0 %v178
  %v483 = vpop.f32.mrf.mxu0
  %v484 = vadd.f32 %v102, %v483
  %v485 = vpop.f32.mrf.mxu0
  %486 = vmatprep.mubr.f32.mxu0 0.0
  %487 = vmatmul.mubr.f32.gmra.mxu0 %v181
  %v488 = vpop.f32.mrf.mxu0
  %v489 = vadd.f32 %v102, %v488
  %v490 = vpop.f32.mrf.mxu0
  %491 = vmatprep.mubr.f32.mxu0 0.0
  %492 = vmatmul.mubr.f32.gmra.mxu0 %v184
  %v493 = vpop.f32.mrf.mxu0
  %v494 = vadd.f32 %v102, %v493
  %v495 = vpop.f32.mrf.mxu0
  %496 = vmatprep.mubr.f32.mxu0 0.0
  %497 = vmatmul.mubr.f32.gmra.mxu0 %v187
  %v498 = vpop.f32.mrf.mxu0
  %v499 = vadd.f32 %v102, %v498
  %v500 = vpop.f32.mrf.mxu0
  %501 = vmatprep.mubr.f32.mxu0 0.0
  %502 = vmatmul.mubr.f32.gmra.mxu0 %v190
  %v503 = vpop.f32.mrf.mxu0
  %v504 = vadd.f32 %v102, %v503
  %v505 = vpop.f32.mrf.mxu0
  %506 = vmatprep.mubr.f32.mxu0 0.0
  %507 = vmatmul.mubr.f32.gmra.mxu0 %v193
  %v508 = vpop.f32.mrf.mxu0
  %v509 = vadd.f32 %v102, %v508
  %v510 = vpop.f32.mrf.mxu0
  %511 = vmatprep.mubr.f32.mxu0 0.0
  %512 = vmatmul.mubr.f32.gmra.mxu0 %v196
  %v513 = vpop.f32.mrf.mxu0
  %v514 = vadd.f32 %v102, %v513
  %v515 = vpop.f32.mrf.mxu0
  %516 = vmatprep.mubr.f32.mxu0 0.0
  %517 = vmatmul.mubr.f32.gmra.mxu0 %v199
  %v518 = vpop.f32.mrf.mxu0
  %v519 = vadd.f32 %v102, %v518
  %v520 = vpop.f32.mrf.mxu0
  %521 = vmatprep.mubr.f32.mxu0 0.0
  %522 = vmatmul.mubr.f32.gmra.mxu0 %v202
  %v523 = vpop.f32.mrf.mxu0
  %v524 = vadd.f32 %v102, %v523
  %v525 = vpop.f32.mrf.mxu0
  %526 = vmatprep.mubr.f32.mxu0 0.0
  %527 = vmatmul.mubr.f32.gmra.mxu0 %v205
  %v528 = vpop.f32.mrf.mxu0
  %v529 = vadd.f32 %v102, %v528
  %v530 = vpop.f32.mrf.mxu0
  %531 = vmatprep.mubr.f32.mxu0 0.0
  %532 = vmatmul.mubr.f32.gmra.mxu0 %v208
  %v533 = vpop.f32.mrf.mxu0
  %v534 = vadd.f32 %v102, %v533
  %v535 = vpop.f32.mrf.mxu0
  %536 = vmatprep.mubr.f32.mxu0 0.0
  %537 = vmatmul.mubr.f32.gmra.mxu0 %v211
  %v538 = vpop.f32.mrf.mxu0
  %v539 = vadd.f32 %v102, %v538
  %v540 = vpop.f32.mrf.mxu0
  %541 = vmatprep.mubr.f32.mxu0 0.0
  %542 = vmatmul.mubr.f32.gmra.mxu0 %v214
  %v543 = vpop.f32.mrf.mxu0
  %v544 = vadd.f32 %v102, %v543
  %v545 = vpop.f32.mrf.mxu0
  %546 = vmatprep.mubr.f32.mxu0 0.0
  %547 = vmatmul.mubr.f32.gmra.mxu0 %v217
  %v548 = vpop.f32.mrf.mxu0
  %v549 = vadd.f32 %v102, %v548
  %v550 = vpop.f32.mrf.mxu0
  %551 = vmatprep.mubr.f32.mxu0 0.0
  %552 = vmatmul.mubr.f32.gmra.mxu0 %v220
  %v553 = vpop.f32.mrf.mxu0
  %v554 = vadd.f32 %v102, %v553
  %v555 = vpop.f32.mrf.mxu0
  %556 = vmatprep.mubr.f32.mxu0 0.0
  %557 = vmatmul.mubr.f32.gmra.mxu0 %v223
  %v558 = vpop.f32.mrf.mxu0
  %v559 = vadd.f32 %v102, %v558
  %v560 = vpop.f32.mrf.mxu0
  %561 = vmatprep.mubr.f32.mxu0 0.0
  %562 = vmatmul.mubr.f32.gmra.mxu0 %v226
  %v563 = vpop.f32.mrf.mxu0
  %v564 = vadd.f32 %v102, %v563
  %v565 = vpop.f32.mrf.mxu0
  %566 = vmatprep.mubr.f32.mxu0 0.0
  %567 = vmatmul.mubr.f32.gmra.mxu0 %v229
  %v568 = vpop.f32.mrf.mxu0
  %v569 = vadd.f32 %v102, %v568
  %v570 = vpop.f32.mrf.mxu0
  %571 = vmatprep.mubr.f32.mxu0 0.0
  %572 = vmatmul.mubr.f32.gmra.mxu0 %v232
  %v573 = vpop.f32.mrf.mxu0
  %v574 = vadd.f32 %v102, %v573
  %v575 = vpop.f32.mrf.mxu0
  %576 = vmatprep.mubr.f32.mxu0 0.0
  %577 = vmatmul.mubr.f32.gmra.mxu0 %v235
  %v578 = vpop.f32.mrf.mxu0
  %v579 = vadd.f32 %v102, %v578
  %v580 = vpop.f32.mrf.mxu0
  %581 = vmatprep.mubr.f32.mxu0 0.0
  %582 = vmatmul.mubr.f32.gmra.mxu0 %v238
  %v583 = vpop.f32.mrf.mxu0
  %v584 = vadd.f32 %v102, %v583
  %v585 = vpop.f32.mrf.mxu0
  %586 = vmatprep.mubr.f32.mxu0 0.0
  %587 = vmatmul.mubr.f32.gmra.mxu0 %v241
  %v588 = vpop.f32.mrf.mxu0
  %v589 = vadd.f32 %v102, %v588
  %v590 = vpop.f32.mrf.mxu0
  %591 = vmatprep.mubr.f32.mxu0 0.0
  %592 = vmatmul.mubr.f32.gmra.mxu0 %v244
  %v593 = vpop.f32.mrf.mxu0
  %v594 = vadd.f32 %v102, %v593
  %v595 = vpop.f32.mrf.mxu0
  %596 = vmatprep.mubr.f32.mxu0 0.0
  %597 = vmatmul.mubr.f32.gmra.mxu0 %v247
  %v598 = vpop.f32.mrf.mxu0
  %v599 = vadd.f32 %v102, %v598
  %v600 = vpop.f32.mrf.mxu0
  %601 = vmatprep.mubr.f32.mxu0 0.0
  %602 = vmatmul.mubr.f32.gmra.mxu0 %v250
  %v603 = vpop.f32.mrf.mxu0
  %v604 = vadd.f32 %v102, %v603
  %v605 = vpop.f32.mrf.mxu0
  %606 = vmatprep.mubr.f32.mxu0 0.0
  %607 = vmatmul.mubr.f32.gmra.mxu0 %v253
  %v608 = vpop.f32.mrf.mxu0
  %v609 = vadd.f32 %v102, %v608
  %v610 = vpop.f32.mrf.mxu0
  %611 = vmatprep.mubr.f32.mxu0 0.0
  %612 = vmatmul.mubr.f32.gmra.mxu0 %v256
  %v613 = vpop.f32.mrf.mxu0
  %v614 = vadd.f32 %v102, %v613
  %v615 = vpop.f32.mrf.mxu0
  %616 = vmatprep.mubr.f32.mxu0 0.0
  %617 = vmatmul.mubr.f32.gmra.mxu0 %v259
  %v618 = vpop.f32.mrf.mxu0
  %v619 = vadd.f32 %v102, %v618
  %v620 = vpop.f32.mrf.mxu0
  %621 = vmatprep.mubr.f32.mxu0 0.0
  %622 = vmatmul.mubr.f32.gmra.mxu0 %v262
  %v623 = vpop.f32.mrf.mxu0
  %v624 = vadd.f32 %v102, %v623
  %v625 = vpop.f32.mrf.mxu0
  %626 = vmatprep.mubr.f32.mxu0 0.0
  %627 = vmatmul.mubr.f32.gmra.mxu0 %v265
  %v628 = vpop.f32.mrf.mxu0
  %v629 = vadd.f32 %v102, %v628
  %v630 = vpop.f32.mrf.mxu0
  %631 = vmatprep.mubr.f32.mxu0 0.0
  %632 = vmatmul.mubr.f32.gmra.mxu0 %v268
  %v633 = vpop.f32.mrf.mxu0
  %v634 = vadd.f32 %v102, %v633
  %v635 = vpop.f32.mrf.mxu0
  %636 = vmatprep.mubr.f32.mxu0 0.0
  %637 = vmatmul.mubr.f32.gmra.mxu0 %v271
  %v638 = vpop.f32.mrf.mxu0
  %v639 = vadd.f32 %v102, %v638
  %v640 = vpop.f32.mrf.mxu0
  %641 = vmatprep.mubr.f32.mxu0 0.0
  %642 = vmatmul.mubr.f32.gmra.mxu0 %v274
  %v643 = vpop.f32.mrf.mxu0
  %v644 = vadd.f32 %v102, %v643
  %v645 = vpop.f32.mrf.mxu0
  %646 = vmatprep.mubr.f32.mxu0 0.0
  %647 = vmatmul.mubr.f32.gmra.mxu0 %v277
  %v648 = vpop.f32.mrf.mxu0
  %v649 = vadd.f32 %v102, %v648
  %v650 = vpop.f32.mrf.mxu0
  %651 = vmatprep.mubr.f32.mxu0 0.0
  %652 = vmatmul.mubr.f32.gmra.mxu0 %v280
  %v653 = vpop.f32.mrf.mxu0
  %v654 = vadd.f32 %v102, %v653
  %v655 = vpop.f32.mrf.mxu0
  %656 = vmatprep.mubr.f32.mxu0 0.0
  %657 = vmatmul.mubr.f32.gmra.mxu0 %v283
  %v658 = vpop.f32.mrf.mxu0
  %v659 = vadd.f32 %v102, %v658
  %v660 = vpop.f32.mrf.mxu0
  %661 = vmatprep.mubr.f32.mxu0 0.0
  %662 = vmatmul.mubr.f32.gmra.mxu0 %v286
  %v663 = vpop.f32.mrf.mxu0
  %v664 = vadd.f32 %v102, %v663
  %v665 = vpop.f32.mrf.mxu0
  %666 = vmatprep.mubr.f32.mxu0 0.0
  %667 = vmatmul.mubr.f32.gmra.mxu0 %v289
  %v668 = vpop.f32.mrf.mxu0
  %v669 = vadd.f32 %v102, %v668
  %v670 = vpop.f32.mrf.mxu0
  %671 = vmatprep.mubr.f32.mxu0 0.0
  %672 = vmatmul.mubr.f32.gmra.mxu0 %v292
  %v673 = vpop.f32.mrf.mxu0
  %v674 = vadd.f32 %v102, %v673
  %v675 = vpop.f32.mrf.mxu0
  %676 = vmatprep.mubr.f32.mxu0 0.0
  %677 = vmatmul.mubr.f32.gmra.mxu0 %v295
  %v678 = vpop.f32.mrf.mxu0
  %v679 = vadd.f32 %v102, %v678
  %v680 = vpop.f32.mrf.mxu0
  %681 = vdwg.mxu0
  %v682 = vmax.f32 %v364, 0.0
  %v683 = vmax.f32 %v369, 0.0
  %v684 = vmax.f32 %v374, 0.0
  %v685 = vmax.f32 %v379, 0.0
  %v686 = vmax.f32 %v384, 0.0
  %v687 = vmax.f32 %v389, 0.0
  %v688 = vmax.f32 %v394, 0.0
  %v689 = vmax.f32 %v399, 0.0
  %v690 = vmax.f32 %v404, 0.0
  %v691 = vmax.f32 %v409, 0.0
  %v692 = vmax.f32 %v414, 0.0
  %v693 = vmax.f32 %v419, 0.0
  %v694 = vmax.f32 %v424, 0.0
  %v695 = vmax.f32 %v429, 0.0
  %v696 = vmax.f32 %v434, 0.0
  %v697 = vmax.f32 %v439, 0.0
  %v698 = vmax.f32 %v444, 0.0
  %v699 = vmax.f32 %v449, 0.0
  %v700 = vmax.f32 %v454, 0.0
  %v701 = vmax.f32 %v459, 0.0
  %v702 = vmax.f32 %v464, 0.0
  %v703 = vmax.f32 %v469, 0.0
  %v704 = vmax.f32 %v474, 0.0
  %v705 = vmax.f32 %v479, 0.0
  %v706 = vmax.f32 %v484, 0.0
  %v707 = vmax.f32 %v489, 0.0
  %v708 = vmax.f32 %v494, 0.0
  %v709 = vmax.f32 %v499, 0.0
  %v710 = vmax.f32 %v504, 0.0
  %v711 = vmax.f32 %v509, 0.0
  %v712 = vmax.f32 %v514, 0.0
  %v713 = vmax.f32 %v519, 0.0
  %v714 = vmax.f32 %v524, 0.0
  %v715 = vmax.f32 %v529, 0.0
  %v716 = vmax.f32 %v534, 0.0
  %v717 = vmax.f32 %v539, 0.0
  %v718 = vmax.f32 %v544, 0.0
  %v719 = vmax.f32 %v549, 0.0
  %v720 = vmax.f32 %v554, 0.0
  %v721 = vmax.f32 %v559, 0.0
  %v722 = vmax.f32 %v564, 0.0
  %v723 = vmax.f32 %v569, 0.0
  %v724 = vmax.f32 %v574, 0.0
  %v725 = vmax.f32 %v579, 0.0
  %v726 = vmax.f32 %v584, 0.0
  %v727 = vmax.f32 %v589, 0.0
  %v728 = vmax.f32 %v594, 0.0
  %v729 = vmax.f32 %v599, 0.0
  %v730 = vmax.f32 %v604, 0.0
  %v731 = vmax.f32 %v609, 0.0
  %v732 = vmax.f32 %v614, 0.0
  %v733 = vmax.f32 %v619, 0.0
  %v734 = vmax.f32 %v624, 0.0
  %v735 = vmax.f32 %v629, 0.0
  %v736 = vmax.f32 %v634, 0.0
  %v737 = vmax.f32 %v639, 0.0
  %v738 = vmax.f32 %v644, 0.0
  %v739 = vmax.f32 %v649, 0.0
  %v740 = vmax.f32 %v654, 0.0
  %v741 = vmax.f32 %v659, 0.0
  %v742 = vmax.f32 %v664, 0.0
  %v743 = vmax.f32 %v669, 0.0
  %v744 = vmax.f32 %v674, 0.0
  %v745 = vmax.f32 %v679, 0.0
  %v746 = vld [vmem:[%s3] sm:$0xff]
  %v747 = vld [vmem:[%s3 + $0x8] sm:$0xff]
  %v748 = vld [vmem:[%s3 + $0x10] sm:$0xff]
  %v749 = vld [vmem:[%s3 + $0x18] sm:$0xff]
  %v750 = vld [vmem:[%s3 + $0x20] sm:$0xff]
  %v751 = vld [vmem:[%s3 + $0x28] sm:$0xff]
  %v752 = vld [vmem:[%s3 + $0x30] sm:$0xff]
  %v753 = vld [vmem:[%s3 + $0x38] sm:$0xff]
  %v754 = vld [vmem:[%s3 + $0x40] sm:$0xff]
  %v755 = vld [vmem:[%s3 + $0x48] sm:$0xff]
  %v756 = vld [vmem:[%s3 + $0x50] sm:$0xff]
  %v757 = vld [vmem:[%s3 + $0x58] sm:$0xff]
  %v758 = vld [vmem:[%s3 + $0x60] sm:$0xff]
  %v759 = vld [vmem:[%s3 + $0x68] sm:$0xff]
  %v760 = vld [vmem:[%s3 + $0x70] sm:$0xff]
  %v761 = vld [vmem:[%s3 + $0x78] sm:$0xff]
  %v762 = vld [vmem:[%s4] sm:$0x1]
  %v764 = vlaneseq
  %v765 = vshrl.u32 %v764, 7
  %v766 = vsub.s32 0, %v765
  %v767 = vrot.slane %v762, %v766
  %769 = vmatprep.subr.mxu0 0.0
  %770 = vmatpush1.msra.mxu0 %v761
  %771 = vmatprep.subr.mxu0 0.0
  %772 = vmatpush1.msra.mxu0 %v760
  %773 = vmatprep.subr.mxu0 0.0
  %774 = vmatpush1.msra.mxu0 %v759
  %775 = vmatprep.subr.mxu0 0.0
  %776 = vmatpush1.msra.mxu0 %v758
  %777 = vmatprep.subr.mxu0 0.0
  %778 = vmatpush1.msra.mxu0 %v757
  %779 = vmatprep.subr.mxu0 0.0
  %780 = vmatpush1.msra.mxu0 %v756
  %781 = vmatprep.subr.mxu0 0.0
  %782 = vmatpush1.msra.mxu0 %v755
  %783 = vmatprep.subr.mxu0 0.0
  %784 = vmatpush1.msra.mxu0 %v754
  %785 = vmatprep.subr.mxu0 0.0
  %786 = vmatpush1.msra.mxu0 %v753
  %787 = vmatprep.subr.mxu0 0.0
  %788 = vmatpush1.msra.mxu0 %v752
  %789 = vmatprep.subr.mxu0 0.0
  %790 = vmatpush1.msra.mxu0 %v751
  %791 = vmatprep.subr.mxu0 0.0
  %792 = vmatpush1.msra.mxu0 %v750
  %793 = vmatprep.subr.mxu0 0.0
  %794 = vmatpush1.msra.mxu0 %v749
  %795 = vmatprep.subr.mxu0 0.0
  %796 = vmatpush1.msra.mxu0 %v748
  %797 = vmatprep.subr.mxu0 0.0
  %798 = vmatpush1.msra.mxu0 %v747
  %799 = vmatprep.subr.mxu0 0.0
  %800 = vmatpush1.msra.mxu0 %v746
  %801 = vmatprep.subr.mxu0 0.0
  %802 = vmatpush2.msra.mxu0 0.0
  %803 = vmatprep.subr.mxu0 0.0
  %804 = vmatpush2.msra.mxu0 0.0
  %805 = vmatprep.subr.mxu0 0.0
  %806 = vmatpush2.msra.mxu0 0.0
  %807 = vmatprep.subr.mxu0 0.0
  %808 = vmatpush2.msra.mxu0 0.0
  %809 = vmatprep.subr.mxu0 0.0
  %810 = vmatpush2.msra.mxu0 0.0
  %811 = vmatprep.subr.mxu0 0.0
  %812 = vmatpush2.msra.mxu0 0.0
  %813 = vmatprep.subr.mxu0 0.0
  %814 = vmatpush2.msra.mxu0 0.0
  %815 = vmatprep.subr.mxu0 0.0
  %816 = vmatpush2.msra.mxu0 0.0
  %817 = vmatprep.subr.mxu0 0.0
  %818 = vmatpush2.msra.mxu0 0.0
  %819 = vmatprep.subr.mxu0 0.0
  %820 = vmatpush2.msra.mxu0 0.0
  %821 = vmatprep.subr.mxu0 0.0
  %822 = vmatpush2.msra.mxu0 0.0
  %823 = vmatprep.subr.mxu0 0.0
  %824 = vmatpush2.msra.mxu0 0.0
  %825 = vmatprep.subr.mxu0 0.0
  %826 = vmatpush2.msra.mxu0 0.0
  %827 = vmatprep.subr.mxu0 0.0
  %828 = vmatpush2.msra.mxu0 0.0
  %829 = vmatprep.subr.mxu0 0.0
  %830 = vmatpush2.msra.mxu0 0.0
  %831 = vmatprep.subr.mxu0 0.0
  %832 = vmatpush2.msra.mxu0 0.0
  %833 = vmatprep.mubr.f32.mxu0 0.0
  %834 = vmatmul.mubr.f32.gmra.mxu0 %v682
  %v835 = vpop.f32.mrf.mxu0
  %v836 = vadd.f32 %v767, %v835
  %v837 = vpop.f32.mrf.mxu0
  %838 = vmatprep.mubr.f32.mxu0 0.0
  %839 = vmatmul.mubr.f32.gmra.mxu0 %v683
  %v840 = vpop.f32.mrf.mxu0
  %v841 = vadd.f32 %v767, %v840
  %v842 = vpop.f32.mrf.mxu0
  %843 = vmatprep.mubr.f32.mxu0 0.0
  %844 = vmatmul.mubr.f32.gmra.mxu0 %v684
  %v845 = vpop.f32.mrf.mxu0
  %v846 = vadd.f32 %v767, %v845
  %v847 = vpop.f32.mrf.mxu0
  %848 = vmatprep.mubr.f32.mxu0 0.0
  %849 = vmatmul.mubr.f32.gmra.mxu0 %v685
  %v850 = vpop.f32.mrf.mxu0
  %v851 = vadd.f32 %v767, %v850
  %v852 = vpop.f32.mrf.mxu0
  %853 = vmatprep.mubr.f32.mxu0 0.0
  %854 = vmatmul.mubr.f32.gmra.mxu0 %v686
  %v855 = vpop.f32.mrf.mxu0
  %v856 = vadd.f32 %v767, %v855
  %v857 = vpop.f32.mrf.mxu0
  %858 = vmatprep.mubr.f32.mxu0 0.0
  %859 = vmatmul.mubr.f32.gmra.mxu0 %v687
  %v860 = vpop.f32.mrf.mxu0
  %v861 = vadd.f32 %v767, %v860
  %v862 = vpop.f32.mrf.mxu0
  %863 = vmatprep.mubr.f32.mxu0 0.0
  %864 = vmatmul.mubr.f32.gmra.mxu0 %v688
  %v865 = vpop.f32.mrf.mxu0
  %v866 = vadd.f32 %v767, %v865
  %v867 = vpop.f32.mrf.mxu0
  %868 = vmatprep.mubr.f32.mxu0 0.0
  %869 = vmatmul.mubr.f32.gmra.mxu0 %v689
  %v870 = vpop.f32.mrf.mxu0
  %v871 = vadd.f32 %v767, %v870
  %v872 = vpop.f32.mrf.mxu0
  %873 = vmatprep.mubr.f32.mxu0 0.0
  %874 = vmatmul.mubr.f32.gmra.mxu0 %v690
  %v875 = vpop.f32.mrf.mxu0
  %v876 = vadd.f32 %v767, %v875
  %v877 = vpop.f32.mrf.mxu0
  %878 = vmatprep.mubr.f32.mxu0 0.0
  %879 = vmatmul.mubr.f32.gmra.mxu0 %v691
  %v880 = vpop.f32.mrf.mxu0
  %v881 = vadd.f32 %v767, %v880
  %v882 = vpop.f32.mrf.mxu0
  %883 = vmatprep.mubr.f32.mxu0 0.0
  %884 = vmatmul.mubr.f32.gmra.mxu0 %v692
  %v885 = vpop.f32.mrf.mxu0
  %v886 = vadd.f32 %v767, %v885
  %v887 = vpop.f32.mrf.mxu0
  %888 = vmatprep.mubr.f32.mxu0 0.0
  %889 = vmatmul.mubr.f32.gmra.mxu0 %v693
  %v890 = vpop.f32.mrf.mxu0
  %v891 = vadd.f32 %v767, %v890
  %v892 = vpop.f32.mrf.mxu0
  %893 = vmatprep.mubr.f32.mxu0 0.0
  %894 = vmatmul.mubr.f32.gmra.mxu0 %v694
  %v895 = vpop.f32.mrf.mxu0
  %v896 = vadd.f32 %v767, %v895
  %v897 = vpop.f32.mrf.mxu0
  %898 = vmatprep.mubr.f32.mxu0 0.0
  %899 = vmatmul.mubr.f32.gmra.mxu0 %v695
  %v900 = vpop.f32.mrf.mxu0
  %v901 = vadd.f32 %v767, %v900
  %v902 = vpop.f32.mrf.mxu0
  %903 = vmatprep.mubr.f32.mxu0 0.0
  %904 = vmatmul.mubr.f32.gmra.mxu0 %v696
  %v905 = vpop.f32.mrf.mxu0
  %v906 = vadd.f32 %v767, %v905
  %v907 = vpop.f32.mrf.mxu0
  %908 = vmatprep.mubr.f32.mxu0 0.0
  %909 = vmatmul.mubr.f32.gmra.mxu0 %v697
  %v910 = vpop.f32.mrf.mxu0
  %v911 = vadd.f32 %v767, %v910
  %v912 = vpop.f32.mrf.mxu0
  %913 = vmatprep.mubr.f32.mxu0 0.0
  %914 = vmatmul.mubr.f32.gmra.mxu0 %v698
  %v915 = vpop.f32.mrf.mxu0
  %v916 = vadd.f32 %v767, %v915
  %v917 = vpop.f32.mrf.mxu0
  %918 = vmatprep.mubr.f32.mxu0 0.0
  %919 = vmatmul.mubr.f32.gmra.mxu0 %v699
  %v920 = vpop.f32.mrf.mxu0
  %v921 = vadd.f32 %v767, %v920
  %v922 = vpop.f32.mrf.mxu0
  %923 = vmatprep.mubr.f32.mxu0 0.0
  %924 = vmatmul.mubr.f32.gmra.mxu0 %v700
  %v925 = vpop.f32.mrf.mxu0
  %v926 = vadd.f32 %v767, %v925
  %v927 = vpop.f32.mrf.mxu0
  %928 = vmatprep.mubr.f32.mxu0 0.0
  %929 = vmatmul.mubr.f32.gmra.mxu0 %v701
  %v930 = vpop.f32.mrf.mxu0
  %v931 = vadd.f32 %v767, %v930
  %v932 = vpop.f32.mrf.mxu0
  %933 = vmatprep.mubr.f32.mxu0 0.0
  %934 = vmatmul.mubr.f32.gmra.mxu0 %v702
  %v935 = vpop.f32.mrf.mxu0
  %v936 = vadd.f32 %v767, %v935
  %v937 = vpop.f32.mrf.mxu0
  %938 = vmatprep.mubr.f32.mxu0 0.0
  %939 = vmatmul.mubr.f32.gmra.mxu0 %v703
  %v940 = vpop.f32.mrf.mxu0
  %v941 = vadd.f32 %v767, %v940
  %v942 = vpop.f32.mrf.mxu0
  %943 = vmatprep.mubr.f32.mxu0 0.0
  %944 = vmatmul.mubr.f32.gmra.mxu0 %v704
  %v945 = vpop.f32.mrf.mxu0
  %v946 = vadd.f32 %v767, %v945
  %v947 = vpop.f32.mrf.mxu0
  %948 = vmatprep.mubr.f32.mxu0 0.0
  %949 = vmatmul.mubr.f32.gmra.mxu0 %v705
  %v950 = vpop.f32.mrf.mxu0
  %v951 = vadd.f32 %v767, %v950
  %v952 = vpop.f32.mrf.mxu0
  %953 = vmatprep.mubr.f32.mxu0 0.0
  %954 = vmatmul.mubr.f32.gmra.mxu0 %v706
  %v955 = vpop.f32.mrf.mxu0
  %v956 = vadd.f32 %v767, %v955
  %v957 = vpop.f32.mrf.mxu0
  %958 = vmatprep.mubr.f32.mxu0 0.0
  %959 = vmatmul.mubr.f32.gmra.mxu0 %v707
  %v960 = vpop.f32.mrf.mxu0
  %v961 = vadd.f32 %v767, %v960
  %v962 = vpop.f32.mrf.mxu0
  %963 = vmatprep.mubr.f32.mxu0 0.0
  %964 = vmatmul.mubr.f32.gmra.mxu0 %v708
  %v965 = vpop.f32.mrf.mxu0
  %v966 = vadd.f32 %v767, %v965
  %v967 = vpop.f32.mrf.mxu0
  %968 = vmatprep.mubr.f32.mxu0 0.0
  %969 = vmatmul.mubr.f32.gmra.mxu0 %v709
  %v970 = vpop.f32.mrf.mxu0
  %v971 = vadd.f32 %v767, %v970
  %v972 = vpop.f32.mrf.mxu0
  %973 = vmatprep.mubr.f32.mxu0 0.0
  %974 = vmatmul.mubr.f32.gmra.mxu0 %v710
  %v975 = vpop.f32.mrf.mxu0
  %v976 = vadd.f32 %v767, %v975
  %v977 = vpop.f32.mrf.mxu0
  %978 = vmatprep.mubr.f32.mxu0 0.0
  %979 = vmatmul.mubr.f32.gmra.mxu0 %v711
  %v980 = vpop.f32.mrf.mxu0
  %v981 = vadd.f32 %v767, %v980
  %v982 = vpop.f32.mrf.mxu0
  %983 = vmatprep.mubr.f32.mxu0 0.0
  %984 = vmatmul.mubr.f32.gmra.mxu0 %v712
  %v985 = vpop.f32.mrf.mxu0
  %v986 = vadd.f32 %v767, %v985
  %v987 = vpop.f32.mrf.mxu0
  %988 = vmatprep.mubr.f32.mxu0 0.0
  %989 = vmatmul.mubr.f32.gmra.mxu0 %v713
  %v990 = vpop.f32.mrf.mxu0
  %v991 = vadd.f32 %v767, %v990
  %v992 = vpop.f32.mrf.mxu0
  %993 = vmatprep.mubr.f32.mxu0 0.0
  %994 = vmatmul.mubr.f32.gmra.mxu0 %v714
  %v995 = vpop.f32.mrf.mxu0
  %v996 = vadd.f32 %v767, %v995
  %v997 = vpop.f32.mrf.mxu0
  %998 = vmatprep.mubr.f32.mxu0 0.0
  %999 = vmatmul.mubr.f32.gmra.mxu0 %v715
  %v1000 = vpop.f32.mrf.mxu0
  %v1001 = vadd.f32 %v767, %v1000
  %v1002 = vpop.f32.mrf.mxu0
  %1003 = vmatprep.mubr.f32.mxu0 0.0
  %1004 = vmatmul.mubr.f32.gmra.mxu0 %v716
  %v1005 = vpop.f32.mrf.mxu0
  %v1006 = vadd.f32 %v767, %v1005
  %v1007 = vpop.f32.mrf.mxu0
  %1008 = vmatprep.mubr.f32.mxu0 0.0
  %1009 = vmatmul.mubr.f32.gmra.mxu0 %v717
  %v1010 = vpop.f32.mrf.mxu0
  %v1011 = vadd.f32 %v767, %v1010
  %v1012 = vpop.f32.mrf.mxu0
  %1013 = vmatprep.mubr.f32.mxu0 0.0
  %1014 = vmatmul.mubr.f32.gmra.mxu0 %v718
  %v1015 = vpop.f32.mrf.mxu0
  %v1016 = vadd.f32 %v767, %v1015
  %v1017 = vpop.f32.mrf.mxu0
  %1018 = vmatprep.mubr.f32.mxu0 0.0
  %1019 = vmatmul.mubr.f32.gmra.mxu0 %v719
  %v1020 = vpop.f32.mrf.mxu0
  %v1021 = vadd.f32 %v767, %v1020
  %v1022 = vpop.f32.mrf.mxu0
  %1023 = vmatprep.mubr.f32.mxu0 0.0
  %1024 = vmatmul.mubr.f32.gmra.mxu0 %v720
  %v1025 = vpop.f32.mrf.mxu0
  %v1026 = vadd.f32 %v767, %v1025
  %v1027 = vpop.f32.mrf.mxu0
  %1028 = vmatprep.mubr.f32.mxu0 0.0
  %1029 = vmatmul.mubr.f32.gmra.mxu0 %v721
  %v1030 = vpop.f32.mrf.mxu0
  %v1031 = vadd.f32 %v767, %v1030
  %v1032 = vpop.f32.mrf.mxu0
  %1033 = vmatprep.mubr.f32.mxu0 0.0
  %1034 = vmatmul.mubr.f32.gmra.mxu0 %v722
  %v1035 = vpop.f32.mrf.mxu0
  %v1036 = vadd.f32 %v767, %v1035
  %v1037 = vpop.f32.mrf.mxu0
  %1038 = vmatprep.mubr.f32.mxu0 0.0
  %1039 = vmatmul.mubr.f32.gmra.mxu0 %v723
  %v1040 = vpop.f32.mrf.mxu0
  %v1041 = vadd.f32 %v767, %v1040
  %v1042 = vpop.f32.mrf.mxu0
  %1043 = vmatprep.mubr.f32.mxu0 0.0
  %1044 = vmatmul.mubr.f32.gmra.mxu0 %v724
  %v1045 = vpop.f32.mrf.mxu0
  %v1046 = vadd.f32 %v767, %v1045
  %v1047 = vpop.f32.mrf.mxu0
  %1048 = vmatprep.mubr.f32.mxu0 0.0
  %1049 = vmatmul.mubr.f32.gmra.mxu0 %v725
  %v1050 = vpop.f32.mrf.mxu0
  %v1051 = vadd.f32 %v767, %v1050
  %v1052 = vpop.f32.mrf.mxu0
  %1053 = vmatprep.mubr.f32.mxu0 0.0
  %1054 = vmatmul.mubr.f32.gmra.mxu0 %v726
  %v1055 = vpop.f32.mrf.mxu0
  %v1056 = vadd.f32 %v767, %v1055
  %v1057 = vpop.f32.mrf.mxu0
  %1058 = vmatprep.mubr.f32.mxu0 0.0
  %1059 = vmatmul.mubr.f32.gmra.mxu0 %v727
  %v1060 = vpop.f32.mrf.mxu0
  %v1061 = vadd.f32 %v767, %v1060
  %v1062 = vpop.f32.mrf.mxu0
  %1063 = vmatprep.mubr.f32.mxu0 0.0
  %1064 = vmatmul.mubr.f32.gmra.mxu0 %v728
  %v1065 = vpop.f32.mrf.mxu0
  %v1066 = vadd.f32 %v767, %v1065
  %v1067 = vpop.f32.mrf.mxu0
  %1068 = vmatprep.mubr.f32.mxu0 0.0
  %1069 = vmatmul.mubr.f32.gmra.mxu0 %v729
  %v1070 = vpop.f32.mrf.mxu0
  %v1071 = vadd.f32 %v767, %v1070
  %v1072 = vpop.f32.mrf.mxu0
  %1073 = vmatprep.mubr.f32.mxu0 0.0
  %1074 = vmatmul.mubr.f32.gmra.mxu0 %v730
  %v1075 = vpop.f32.mrf.mxu0
  %v1076 = vadd.f32 %v767, %v1075
  %v1077 = vpop.f32.mrf.mxu0
  %1078 = vmatprep.mubr.f32.mxu0 0.0
  %1079 = vmatmul.mubr.f32.gmra.mxu0 %v731
  %v1080 = vpop.f32.mrf.mxu0
  %v1081 = vadd.f32 %v767, %v1080
  %v1082 = vpop.f32.mrf.mxu0
  %1083 = vmatprep.mubr.f32.mxu0 0.0
  %1084 = vmatmul.mubr.f32.gmra.mxu0 %v732
  %v1085 = vpop.f32.mrf.mxu0
  %v1086 = vadd.f32 %v767, %v1085
  %v1087 = vpop.f32.mrf.mxu0
  %1088 = vmatprep.mubr.f32.mxu0 0.0
  %1089 = vmatmul.mubr.f32.gmra.mxu0 %v733
  %v1090 = vpop.f32.mrf.mxu0
  %v1091 = vadd.f32 %v767, %v1090
  %v1092 = vpop.f32.mrf.mxu0
  %1093 = vmatprep.mubr.f32.mxu0 0.0
  %1094 = vmatmul.mubr.f32.gmra.mxu0 %v734
  %v1095 = vpop.f32.mrf.mxu0
  %v1096 = vadd.f32 %v767, %v1095
  %v1097 = vpop.f32.mrf.mxu0
  %1098 = vmatprep.mubr.f32.mxu0 0.0
  %1099 = vmatmul.mubr.f32.gmra.mxu0 %v735
  %v1100 = vpop.f32.mrf.mxu0
  %v1101 = vadd.f32 %v767, %v1100
  %v1102 = vpop.f32.mrf.mxu0
  %1103 = vmatprep.mubr.f32.mxu0 0.0
  %1104 = vmatmul.mubr.f32.gmra.mxu0 %v736
  %v1105 = vpop.f32.mrf.mxu0
  %v1106 = vadd.f32 %v767, %v1105
  %v1107 = vpop.f32.mrf.mxu0
  %1108 = vmatprep.mubr.f32.mxu0 0.0
  %1109 = vmatmul.mubr.f32.gmra.mxu0 %v737
  %v1110 = vpop.f32.mrf.mxu0
  %v1111 = vadd.f32 %v767, %v1110
  %v1112 = vpop.f32.mrf.mxu0
  %1113 = vmatprep.mubr.f32.mxu0 0.0
  %1114 = vmatmul.mubr.f32.gmra.mxu0 %v738
  %v1115 = vpop.f32.mrf.mxu0
  %v1116 = vadd.f32 %v767, %v1115
  %v1117 = vpop.f32.mrf.mxu0
  %1118 = vmatprep.mubr.f32.mxu0 0.0
  %1119 = vmatmul.mubr.f32.gmra.mxu0 %v739
  %v1120 = vpop.f32.mrf.mxu0
  %v1121 = vadd.f32 %v767, %v1120
  %v1122 = vpop.f32.mrf.mxu0
  %1123 = vmatprep.mubr.f32.mxu0 0.0
  %1124 = vmatmul.mubr.f32.gmra.mxu0 %v740
  %v1125 = vpop.f32.mrf.mxu0
  %v1126 = vadd.f32 %v767, %v1125
  %v1127 = vpop.f32.mrf.mxu0
  %1128 = vmatprep.mubr.f32.mxu0 0.0
  %1129 = vmatmul.mubr.f32.gmra.mxu0 %v741
  %v1130 = vpop.f32.mrf.mxu0
  %v1131 = vadd.f32 %v767, %v1130
  %v1132 = vpop.f32.mrf.mxu0
  %1133 = vmatprep.mubr.f32.mxu0 0.0
  %1134 = vmatmul.mubr.f32.gmra.mxu0 %v742
  %v1135 = vpop.f32.mrf.mxu0
  %v1136 = vadd.f32 %v767, %v1135
  %v1137 = vpop.f32.mrf.mxu0
  %1138 = vmatprep.mubr.f32.mxu0 0.0
  %1139 = vmatmul.mubr.f32.gmra.mxu0 %v743
  %v1140 = vpop.f32.mrf.mxu0
  %v1141 = vadd.f32 %v767, %v1140
  %v1142 = vpop.f32.mrf.mxu0
  %1143 = vmatprep.mubr.f32.mxu0 0.0
  %1144 = vmatmul.mubr.f32.gmra.mxu0 %v744
  %v1145 = vpop.f32.mrf.mxu0
  %v1146 = vadd.f32 %v767, %v1145
  %v1147 = vpop.f32.mrf.mxu0
  %1148 = vmatprep.mubr.f32.mxu0 0.0
  %1149 = vmatmul.mubr.f32.gmra.mxu0 %v745
  %v1150 = vpop.f32.mrf.mxu0
  %v1151 = vadd.f32 %v767, %v1150
  %v1152 = vpop.f32.mrf.mxu0
  %1153 = vdwg.mxu0
  %v1154 = vmax.f32 %v836, 0.0
  %v1155 = vmax.f32 %v841, 0.0
  %v1156 = vmax.f32 %v846, 0.0
  %v1157 = vmax.f32 %v851, 0.0
  %v1158 = vmax.f32 %v856, 0.0
  %v1159 = vmax.f32 %v861, 0.0
  %v1160 = vmax.f32 %v866, 0.0
  %v1161 = vmax.f32 %v871, 0.0
  %v1162 = vmax.f32 %v876, 0.0
  %v1163 = vmax.f32 %v881, 0.0
  %v1164 = vmax.f32 %v886, 0.0
  %v1165 = vmax.f32 %v891, 0.0
  %v1166 = vmax.f32 %v896, 0.0
  %v1167 = vmax.f32 %v901, 0.0
  %v1168 = vmax.f32 %v906, 0.0
  %v1169 = vmax.f32 %v911, 0.0
  %v1170 = vmax.f32 %v916, 0.0
  %v1171 = vmax.f32 %v921, 0.0
  %v1172 = vmax.f32 %v926, 0.0
  %v1173 = vmax.f32 %v931, 0.0
  %v1174 = vmax.f32 %v936, 0.0
  %v1175 = vmax.f32 %v941, 0.0
  %v1176 = vmax.f32 %v946, 0.0
  %v1177 = vmax.f32 %v951, 0.0
  %v1178 = vmax.f32 %v956, 0.0
  %v1179 = vmax.f32 %v961, 0.0
  %v1180 = vmax.f32 %v966, 0.0
  %v1181 = vmax.f32 %v971, 0.0
  %v1182 = vmax.f32 %v976, 0.0
  %v1183 = vmax.f32 %v981, 0.0
  %v1184 = vmax.f32 %v986, 0.0
  %v1185 = vmax.f32 %v991, 0.0
  %v1186 = vmax.f32 %v996, 0.0
  %v1187 = vmax.f32 %v1001, 0.0
  %v1188 = vmax.f32 %v1006, 0.0
  %v1189 = vmax.f32 %v1011, 0.0
  %v1190 = vmax.f32 %v1016, 0.0
  %v1191 = vmax.f32 %v1021, 0.0
  %v1192 = vmax.f32 %v1026, 0.0
  %v1193 = vmax.f32 %v1031, 0.0
  %v1194 = vmax.f32 %v1036, 0.0
  %v1195 = vmax.f32 %v1041, 0.0
  %v1196 = vmax.f32 %v1046, 0.0
  %v1197 = vmax.f32 %v1051, 0.0
  %v1198 = vmax.f32 %v1056, 0.0
  %v1199 = vmax.f32 %v1061, 0.0
  %v1200 = vmax.f32 %v1066, 0.0
  %v1201 = vmax.f32 %v1071, 0.0
  %v1202 = vmax.f32 %v1076, 0.0
  %v1203 = vmax.f32 %v1081, 0.0
  %v1204 = vmax.f32 %v1086, 0.0
  %v1205 = vmax.f32 %v1091, 0.0
  %v1206 = vmax.f32 %v1096, 0.0
  %v1207 = vmax.f32 %v1101, 0.0
  %v1208 = vmax.f32 %v1106, 0.0
  %v1209 = vmax.f32 %v1111, 0.0
  %v1210 = vmax.f32 %v1116, 0.0
  %v1211 = vmax.f32 %v1121, 0.0
  %v1212 = vmax.f32 %v1126, 0.0
  %v1213 = vmax.f32 %v1131, 0.0
  %v1214 = vmax.f32 %v1136, 0.0
  %v1215 = vmax.f32 %v1141, 0.0
  %v1216 = vmax.f32 %v1146, 0.0
  %v1217 = vmax.f32 %v1151, 0.0
  %v1218 = vld [vmem:[%s5] sm:$0xff]
  %v1219 = vld [vmem:[%s5 + $0x8] sm:$0xff]
  %v1220 = vld [vmem:[%s5 + $0x10] sm:$0xff]
  %v1221 = vld [vmem:[%s5 + $0x18] sm:$0xff]
  %v1222 = vld [vmem:[%s5 + $0x20] sm:$0xff]
  %v1223 = vld [vmem:[%s5 + $0x28] sm:$0xff]
  %v1224 = vld [vmem:[%s5 + $0x30] sm:$0xff]
  %v1225 = vld [vmem:[%s5 + $0x38] sm:$0xff]
  %v1226 = vld [vmem:[%s5 + $0x40] sm:$0xff]
  %v1227 = vld [vmem:[%s5 + $0x48] sm:$0xff]
  %v1228 = vld [vmem:[%s5 + $0x50] sm:$0xff]
  %v1229 = vld [vmem:[%s5 + $0x58] sm:$0xff]
  %v1230 = vld [vmem:[%s5 + $0x60] sm:$0xff]
  %v1231 = vld [vmem:[%s5 + $0x68] sm:$0xff]
  %v1232 = vld [vmem:[%s5 + $0x70] sm:$0xff]
  %v1233 = vld [vmem:[%s5 + $0x78] sm:$0xff]
  %v1234 = vld [vmem:[%s6] sm:$0x1]
  %v1236 = vlaneseq
  %v1237 = vshrl.u32 %v1236, 7
  %v1238 = vsub.s32 0, %v1237
  %v1239 = vrot.slane %v1234, %v1238
  %1241 = vmatprep.subr.mxu0 0.0
  %1242 = vmatpush1.msra.mxu0 %v1233
  %1243 = vmatprep.subr.mxu0 0.0
  %1244 = vmatpush1.msra.mxu0 %v1232
  %1245 = vmatprep.subr.mxu0 0.0
  %1246 = vmatpush1.msra.mxu0 %v1231
  %1247 = vmatprep.subr.mxu0 0.0
  %1248 = vmatpush1.msra.mxu0 %v1230
  %1249 = vmatprep.subr.mxu0 0.0
  %1250 = vmatpush1.msra.mxu0 %v1229
  %1251 = vmatprep.subr.mxu0 0.0
  %1252 = vmatpush1.msra.mxu0 %v1228
  %1253 = vmatprep.subr.mxu0 0.0
  %1254 = vmatpush1.msra.mxu0 %v1227
  %1255 = vmatprep.subr.mxu0 0.0
  %1256 = vmatpush1.msra.mxu0 %v1226
  %1257 = vmatprep.subr.mxu0 0.0
  %1258 = vmatpush1.msra.mxu0 %v1225
  %1259 = vmatprep.subr.mxu0 0.0
  %1260 = vmatpush1.msra.mxu0 %v1224
  %1261 = vmatprep.subr.mxu0 0.0
  %1262 = vmatpush1.msra.mxu0 %v1223
  %1263 = vmatprep.subr.mxu0 0.0
  %1264 = vmatpush1.msra.mxu0 %v1222
  %1265 = vmatprep.subr.mxu0 0.0
  %1266 = vmatpush1.msra.mxu0 %v1221
  %1267 = vmatprep.subr.mxu0 0.0
  %1268 = vmatpush1.msra.mxu0 %v1220
  %1269 = vmatprep.subr.mxu0 0.0
  %1270 = vmatpush1.msra.mxu0 %v1219
  %1271 = vmatprep.subr.mxu0 0.0
  %1272 = vmatpush1.msra.mxu0 %v1218
  %1273 = vmatprep.subr.mxu0 0.0
  %1274 = vmatpush2.msra.mxu0 0.0
  %1275 = vmatprep.subr.mxu0 0.0
  %1276 = vmatpush2.msra.mxu0 0.0
  %1277 = vmatprep.subr.mxu0 0.0
  %1278 = vmatpush2.msra.mxu0 0.0
  %1279 = vmatprep.subr.mxu0 0.0
  %1280 = vmatpush2.msra.mxu0 0.0
  %1281 = vmatprep.subr.mxu0 0.0
  %1282 = vmatpush2.msra.mxu0 0.0
  %1283 = vmatprep.subr.mxu0 0.0
  %1284 = vmatpush2.msra.mxu0 0.0
  %1285 = vmatprep.subr.mxu0 0.0
  %1286 = vmatpush2.msra.mxu0 0.0
  %1287 = vmatprep.subr.mxu0 0.0
  %1288 = vmatpush2.msra.mxu0 0.0
  %1289 = vmatprep.subr.mxu0 0.0
  %1290 = vmatpush2.msra.mxu0 0.0
  %1291 = vmatprep.subr.mxu0 0.0
  %1292 = vmatpush2.msra.mxu0 0.0
  %1293 = vmatprep.subr.mxu0 0.0
  %1294 = vmatpush2.msra.mxu0 0.0
  %1295 = vmatprep.subr.mxu0 0.0
  %1296 = vmatpush2.msra.mxu0 0.0
  %1297 = vmatprep.subr.mxu0 0.0
  %1298 = vmatpush2.msra.mxu0 0.0
  %1299 = vmatprep.subr.mxu0 0.0
  %1300 = vmatpush2.msra.mxu0 0.0
  %1301 = vmatprep.subr.mxu0 0.0
  %1302 = vmatpush2.msra.mxu0 0.0
  %1303 = vmatprep.subr.mxu0 0.0
  %1304 = vmatpush2.msra.mxu0 0.0
  %1305 = vmatprep.mubr.f32.mxu0 0.0
  %1306 = vmatmul.mubr.f32.gmra.mxu0 %v1154
  %v1307 = vpop.f32.mrf.mxu0
  %v1308 = vadd.f32 %v1239, %v1307
  %v1309 = vpop.f32.mrf.mxu0
  %1310 = vmatprep.mubr.f32.mxu0 0.0
  %1311 = vmatmul.mubr.f32.gmra.mxu0 %v1155
  %v1312 = vpop.f32.mrf.mxu0
  %v1313 = vadd.f32 %v1239, %v1312
  %v1314 = vpop.f32.mrf.mxu0
  %1315 = vmatprep.mubr.f32.mxu0 0.0
  %1316 = vmatmul.mubr.f32.gmra.mxu0 %v1156
  %v1317 = vpop.f32.mrf.mxu0
  %v1318 = vadd.f32 %v1239, %v1317
  %v1319 = vpop.f32.mrf.mxu0
  %1320 = vmatprep.mubr.f32.mxu0 0.0
  %1321 = vmatmul.mubr.f32.gmra.mxu0 %v1157
  %v1322 = vpop.f32.mrf.mxu0
  %v1323 = vadd.f32 %v1239, %v1322
  %v1324 = vpop.f32.mrf.mxu0
  %1325 = vmatprep.mubr.f32.mxu0 0.0
  %1326 = vmatmul.mubr.f32.gmra.mxu0 %v1158
  %v1327 = vpop.f32.mrf.mxu0
  %v1328 = vadd.f32 %v1239, %v1327
  %v1329 = vpop.f32.mrf.mxu0
  %1330 = vmatprep.mubr.f32.mxu0 0.0
  %1331 = vmatmul.mubr.f32.gmra.mxu0 %v1159
  %v1332 = vpop.f32.mrf.mxu0
  %v1333 = vadd.f32 %v1239, %v1332
  %v1334 = vpop.f32.mrf.mxu0
  %1335 = vmatprep.mubr.f32.mxu0 0.0
  %1336 = vmatmul.mubr.f32.gmra.mxu0 %v1160
  %v1337 = vpop.f32.mrf.mxu0
  %v1338 = vadd.f32 %v1239, %v1337
  %v1339 = vpop.f32.mrf.mxu0
  %1340 = vmatprep.mubr.f32.mxu0 0.0
  %1341 = vmatmul.mubr.f32.gmra.mxu0 %v1161
  %v1342 = vpop.f32.mrf.mxu0
  %v1343 = vadd.f32 %v1239, %v1342
  %v1344 = vpop.f32.mrf.mxu0
  %1345 = vmatprep.mubr.f32.mxu0 0.0
  %1346 = vmatmul.mubr.f32.gmra.mxu0 %v1162
  %v1347 = vpop.f32.mrf.mxu0
  %v1348 = vadd.f32 %v1239, %v1347
  %v1349 = vpop.f32.mrf.mxu0
  %1350 = vmatprep.mubr.f32.mxu0 0.0
  %1351 = vmatmul.mubr.f32.gmra.mxu0 %v1163
  %v1352 = vpop.f32.mrf.mxu0
  %v1353 = vadd.f32 %v1239, %v1352
  %v1354 = vpop.f32.mrf.mxu0
  %1355 = vmatprep.mubr.f32.mxu0 0.0
  %1356 = vmatmul.mubr.f32.gmra.mxu0 %v1164
  %v1357 = vpop.f32.mrf.mxu0
  %v1358 = vadd.f32 %v1239, %v1357
  %v1359 = vpop.f32.mrf.mxu0
  %1360 = vmatprep.mubr.f32.mxu0 0.0
  %1361 = vmatmul.mubr.f32.gmra.mxu0 %v1165
  %v1362 = vpop.f32.mrf.mxu0
  %v1363 = vadd.f32 %v1239, %v1362
  %v1364 = vpop.f32.mrf.mxu0
  %1365 = vmatprep.mubr.f32.mxu0 0.0
  %1366 = vmatmul.mubr.f32.gmra.mxu0 %v1166
  %v1367 = vpop.f32.mrf.mxu0
  %v1368 = vadd.f32 %v1239, %v1367
  %v1369 = vpop.f32.mrf.mxu0
  %1370 = vmatprep.mubr.f32.mxu0 0.0
  %1371 = vmatmul.mubr.f32.gmra.mxu0 %v1167
  %v1372 = vpop.f32.mrf.mxu0
  %v1373 = vadd.f32 %v1239, %v1372
  %v1374 = vpop.f32.mrf.mxu0
  %1375 = vmatprep.mubr.f32.mxu0 0.0
  %1376 = vmatmul.mubr.f32.gmra.mxu0 %v1168
  %v1377 = vpop.f32.mrf.mxu0
  %v1378 = vadd.f32 %v1239, %v1377
  %v1379 = vpop.f32.mrf.mxu0
  %1380 = vmatprep.mubr.f32.mxu0 0.0
  %1381 = vmatmul.mubr.f32.gmra.mxu0 %v1169
  %v1382 = vpop.f32.mrf.mxu0
  %v1383 = vadd.f32 %v1239, %v1382
  %v1384 = vpop.f32.mrf.mxu0
  %1385 = vmatprep.mubr.f32.mxu0 0.0
  %1386 = vmatmul.mubr.f32.gmra.mxu0 %v1170
  %v1387 = vpop.f32.mrf.mxu0
  %v1388 = vadd.f32 %v1239, %v1387
  %v1389 = vpop.f32.mrf.mxu0
  %1390 = vmatprep.mubr.f32.mxu0 0.0
  %1391 = vmatmul.mubr.f32.gmra.mxu0 %v1171
  %v1392 = vpop.f32.mrf.mxu0
  %v1393 = vadd.f32 %v1239, %v1392
  %v1394 = vpop.f32.mrf.mxu0
  %1395 = vmatprep.mubr.f32.mxu0 0.0
  %1396 = vmatmul.mubr.f32.gmra.mxu0 %v1172
  %v1397 = vpop.f32.mrf.mxu0
  %v1398 = vadd.f32 %v1239, %v1397
  %v1399 = vpop.f32.mrf.mxu0
  %1400 = vmatprep.mubr.f32.mxu0 0.0
  %1401 = vmatmul.mubr.f32.gmra.mxu0 %v1173
  %v1402 = vpop.f32.mrf.mxu0
  %v1403 = vadd.f32 %v1239, %v1402
  %v1404 = vpop.f32.mrf.mxu0
  %1405 = vmatprep.mubr.f32.mxu0 0.0
  %1406 = vmatmul.mubr.f32.gmra.mxu0 %v1174
  %v1407 = vpop.f32.mrf.mxu0
  %v1408 = vadd.f32 %v1239, %v1407
  %v1409 = vpop.f32.mrf.mxu0
  %1410 = vmatprep.mubr.f32.mxu0 0.0
  %1411 = vmatmul.mubr.f32.gmra.mxu0 %v1175
  %v1412 = vpop.f32.mrf.mxu0
  %v1413 = vadd.f32 %v1239, %v1412
  %v1414 = vpop.f32.mrf.mxu0
  %1415 = vmatprep.mubr.f32.mxu0 0.0
  %1416 = vmatmul.mubr.f32.gmra.mxu0 %v1176
  %v1417 = vpop.f32.mrf.mxu0
  %v1418 = vadd.f32 %v1239, %v1417
  %v1419 = vpop.f32.mrf.mxu0
  %1420 = vmatprep.mubr.f32.mxu0 0.0
  %1421 = vmatmul.mubr.f32.gmra.mxu0 %v1177
  %v1422 = vpop.f32.mrf.mxu0
  %v1423 = vadd.f32 %v1239, %v1422
  %v1424 = vpop.f32.mrf.mxu0
  %1425 = vmatprep.mubr.f32.mxu0 0.0
  %1426 = vmatmul.mubr.f32.gmra.mxu0 %v1178
  %v1427 = vpop.f32.mrf.mxu0
  %v1428 = vadd.f32 %v1239, %v1427
  %v1429 = vpop.f32.mrf.mxu0
  %1430 = vmatprep.mubr.f32.mxu0 0.0
  %1431 = vmatmul.mubr.f32.gmra.mxu0 %v1179
  %v1432 = vpop.f32.mrf.mxu0
  %v1433 = vadd.f32 %v1239, %v1432
  %v1434 = vpop.f32.mrf.mxu0
  %1435 = vmatprep.mubr.f32.mxu0 0.0
  %1436 = vmatmul.mubr.f32.gmra.mxu0 %v1180
  %v1437 = vpop.f32.mrf.mxu0
  %v1438 = vadd.f32 %v1239, %v1437
  %v1439 = vpop.f32.mrf.mxu0
  %1440 = vmatprep.mubr.f32.mxu0 0.0
  %1441 = vmatmul.mubr.f32.gmra.mxu0 %v1181
  %v1442 = vpop.f32.mrf.mxu0
  %v1443 = vadd.f32 %v1239, %v1442
  %v1444 = vpop.f32.mrf.mxu0
  %1445 = vmatprep.mubr.f32.mxu0 0.0
  %1446 = vmatmul.mubr.f32.gmra.mxu0 %v1182
  %v1447 = vpop.f32.mrf.mxu0
  %v1448 = vadd.f32 %v1239, %v1447
  %v1449 = vpop.f32.mrf.mxu0
  %1450 = vmatprep.mubr.f32.mxu0 0.0
  %1451 = vmatmul.mubr.f32.gmra.mxu0 %v1183
  %v1452 = vpop.f32.mrf.mxu0
  %v1453 = vadd.f32 %v1239, %v1452
  %v1454 = vpop.f32.mrf.mxu0
  %1455 = vmatprep.mubr.f32.mxu0 0.0
  %1456 = vmatmul.mubr.f32.gmra.mxu0 %v1184
  %v1457 = vpop.f32.mrf.mxu0
  %v1458 = vadd.f32 %v1239, %v1457
  %v1459 = vpop.f32.mrf.mxu0
  %1460 = vmatprep.mubr.f32.mxu0 0.0
  %1461 = vmatmul.mubr.f32.gmra.mxu0 %v1185
  %v1462 = vpop.f32.mrf.mxu0
  %v1463 = vadd.f32 %v1239, %v1462
  %v1464 = vpop.f32.mrf.mxu0
  %1465 = vmatprep.mubr.f32.mxu0 0.0
  %1466 = vmatmul.mubr.f32.gmra.mxu0 %v1186
  %v1467 = vpop.f32.mrf.mxu0
  %v1468 = vadd.f32 %v1239, %v1467
  %v1469 = vpop.f32.mrf.mxu0
  %1470 = vmatprep.mubr.f32.mxu0 0.0
  %1471 = vmatmul.mubr.f32.gmra.mxu0 %v1187
  %v1472 = vpop.f32.mrf.mxu0
  %v1473 = vadd.f32 %v1239, %v1472
  %v1474 = vpop.f32.mrf.mxu0
  %1475 = vmatprep.mubr.f32.mxu0 0.0
  %1476 = vmatmul.mubr.f32.gmra.mxu0 %v1188
  %v1477 = vpop.f32.mrf.mxu0
  %v1478 = vadd.f32 %v1239, %v1477
  %v1479 = vpop.f32.mrf.mxu0
  %1480 = vmatprep.mubr.f32.mxu0 0.0
  %1481 = vmatmul.mubr.f32.gmra.mxu0 %v1189
  %v1482 = vpop.f32.mrf.mxu0
  %v1483 = vadd.f32 %v1239, %v1482
  %v1484 = vpop.f32.mrf.mxu0
  %1485 = vmatprep.mubr.f32.mxu0 0.0
  %1486 = vmatmul.mubr.f32.gmra.mxu0 %v1190
  %v1487 = vpop.f32.mrf.mxu0
  %v1488 = vadd.f32 %v1239, %v1487
  %v1489 = vpop.f32.mrf.mxu0
  %1490 = vmatprep.mubr.f32.mxu0 0.0
  %1491 = vmatmul.mubr.f32.gmra.mxu0 %v1191
  %v1492 = vpop.f32.mrf.mxu0
  %v1493 = vadd.f32 %v1239, %v1492
  %v1494 = vpop.f32.mrf.mxu0
  %1495 = vmatprep.mubr.f32.mxu0 0.0
  %1496 = vmatmul.mubr.f32.gmra.mxu0 %v1192
  %v1497 = vpop.f32.mrf.mxu0
  %v1498 = vadd.f32 %v1239, %v1497
  %v1499 = vpop.f32.mrf.mxu0
  %1500 = vmatprep.mubr.f32.mxu0 0.0
  %1501 = vmatmul.mubr.f32.gmra.mxu0 %v1193
  %v1502 = vpop.f32.mrf.mxu0
  %v1503 = vadd.f32 %v1239, %v1502
  %v1504 = vpop.f32.mrf.mxu0
  %1505 = vmatprep.mubr.f32.mxu0 0.0
  %1506 = vmatmul.mubr.f32.gmra.mxu0 %v1194
  %v1507 = vpop.f32.mrf.mxu0
  %v1508 = vadd.f32 %v1239, %v1507
  %v1509 = vpop.f32.mrf.mxu0
  %1510 = vmatprep.mubr.f32.mxu0 0.0
  %1511 = vmatmul.mubr.f32.gmra.mxu0 %v1195
  %v1512 = vpop.f32.mrf.mxu0
  %v1513 = vadd.f32 %v1239, %v1512
  %v1514 = vpop.f32.mrf.mxu0
  %1515 = vmatprep.mubr.f32.mxu0 0.0
  %1516 = vmatmul.mubr.f32.gmra.mxu0 %v1196
  %v1517 = vpop.f32.mrf.mxu0
  %v1518 = vadd.f32 %v1239, %v1517
  %v1519 = vpop.f32.mrf.mxu0
  %1520 = vmatprep.mubr.f32.mxu0 0.0
  %1521 = vmatmul.mubr.f32.gmra.mxu0 %v1197
  %v1522 = vpop.f32.mrf.mxu0
  %v1523 = vadd.f32 %v1239, %v1522
  %v1524 = vpop.f32.mrf.mxu0
  %1525 = vmatprep.mubr.f32.mxu0 0.0
  %1526 = vmatmul.mubr.f32.gmra.mxu0 %v1198
  %v1527 = vpop.f32.mrf.mxu0
  %v1528 = vadd.f32 %v1239, %v1527
  %v1529 = vpop.f32.mrf.mxu0
  %1530 = vmatprep.mubr.f32.mxu0 0.0
  %1531 = vmatmul.mubr.f32.gmra.mxu0 %v1199
  %v1532 = vpop.f32.mrf.mxu0
  %v1533 = vadd.f32 %v1239, %v1532
  %v1534 = vpop.f32.mrf.mxu0
  %1535 = vmatprep.mubr.f32.mxu0 0.0
  %1536 = vmatmul.mubr.f32.gmra.mxu0 %v1200
  %v1537 = vpop.f32.mrf.mxu0
  %v1538 = vadd.f32 %v1239, %v1537
  %v1539 = vpop.f32.mrf.mxu0
  %1540 = vmatprep.mubr.f32.mxu0 0.0
  %1541 = vmatmul.mubr.f32.gmra.mxu0 %v1201
  %v1542 = vpop.f32.mrf.mxu0
  %v1543 = vadd.f32 %v1239, %v1542
  %v1544 = vpop.f32.mrf.mxu0
  %1545 = vmatprep.mubr.f32.mxu0 0.0
  %1546 = vmatmul.mubr.f32.gmra.mxu0 %v1202
  %v1547 = vpop.f32.mrf.mxu0
  %v1548 = vadd.f32 %v1239, %v1547
  %v1549 = vpop.f32.mrf.mxu0
  %1550 = vmatprep.mubr.f32.mxu0 0.0
  %1551 = vmatmul.mubr.f32.gmra.mxu0 %v1203
  %v1552 = vpop.f32.mrf.mxu0
  %v1553 = vadd.f32 %v1239, %v1552
  %v1554 = vpop.f32.mrf.mxu0
  %1555 = vmatprep.mubr.f32.mxu0 0.0
  %1556 = vmatmul.mubr.f32.gmra.mxu0 %v1204
  %v1557 = vpop.f32.mrf.mxu0
  %v1558 = vadd.f32 %v1239, %v1557
  %v1559 = vpop.f32.mrf.mxu0
  %1560 = vmatprep.mubr.f32.mxu0 0.0
  %1561 = vmatmul.mubr.f32.gmra.mxu0 %v1205
  %v1562 = vpop.f32.mrf.mxu0
  %v1563 = vadd.f32 %v1239, %v1562
  %v1564 = vpop.f32.mrf.mxu0
  %1565 = vmatprep.mubr.f32.mxu0 0.0
  %1566 = vmatmul.mubr.f32.gmra.mxu0 %v1206
  %v1567 = vpop.f32.mrf.mxu0
  %v1568 = vadd.f32 %v1239, %v1567
  %v1569 = vpop.f32.mrf.mxu0
  %1570 = vmatprep.mubr.f32.mxu0 0.0
  %1571 = vmatmul.mubr.f32.gmra.mxu0 %v1207
  %v1572 = vpop.f32.mrf.mxu0
  %v1573 = vadd.f32 %v1239, %v1572
  %v1574 = vpop.f32.mrf.mxu0
  %1575 = vmatprep.mubr.f32.mxu0 0.0
  %1576 = vmatmul.mubr.f32.gmra.mxu0 %v1208
  %v1577 = vpop.f32.mrf.mxu0
  %v1578 = vadd.f32 %v1239, %v1577
  %v1579 = vpop.f32.mrf.mxu0
  %1580 = vmatprep.mubr.f32.mxu0 0.0
  %1581 = vmatmul.mubr.f32.gmra.mxu0 %v1209
  %v1582 = vpop.f32.mrf.mxu0
  %v1583 = vadd.f32 %v1239, %v1582
  %v1584 = vpop.f32.mrf.mxu0
  %1585 = vmatprep.mubr.f32.mxu0 0.0
  %1586 = vmatmul.mubr.f32.gmra.mxu0 %v1210
  %v1587 = vpop.f32.mrf.mxu0
  %v1588 = vadd.f32 %v1239, %v1587
  %v1589 = vpop.f32.mrf.mxu0
  %1590 = vmatprep.mubr.f32.mxu0 0.0
  %1591 = vmatmul.mubr.f32.gmra.mxu0 %v1211
  %v1592 = vpop.f32.mrf.mxu0
  %v1593 = vadd.f32 %v1239, %v1592
  %v1594 = vpop.f32.mrf.mxu0
  %1595 = vmatprep.mubr.f32.mxu0 0.0
  %1596 = vmatmul.mubr.f32.gmra.mxu0 %v1212
  %v1597 = vpop.f32.mrf.mxu0
  %v1598 = vadd.f32 %v1239, %v1597
  %v1599 = vpop.f32.mrf.mxu0
  %1600 = vmatprep.mubr.f32.mxu0 0.0
  %1601 = vmatmul.mubr.f32.gmra.mxu0 %v1213
  %v1602 = vpop.f32.mrf.mxu0
  %v1603 = vadd.f32 %v1239, %v1602
  %v1604 = vpop.f32.mrf.mxu0
  %1605 = vmatprep.mubr.f32.mxu0 0.0
  %1606 = vmatmul.mubr.f32.gmra.mxu0 %v1214
  %v1607 = vpop.f32.mrf.mxu0
  %v1608 = vadd.f32 %v1239, %v1607
  %v1609 = vpop.f32.mrf.mxu0
  %1610 = vmatprep.mubr.f32.mxu0 0.0
  %1611 = vmatmul.mubr.f32.gmra.mxu0 %v1215
  %v1612 = vpop.f32.mrf.mxu0
  %v1613 = vadd.f32 %v1239, %v1612
  %v1614 = vpop.f32.mrf.mxu0
  %1615 = vmatprep.mubr.f32.mxu0 0.0
  %1616 = vmatmul.mubr.f32.gmra.mxu0 %v1216
  %v1617 = vpop.f32.mrf.mxu0
  %v1618 = vadd.f32 %v1239, %v1617
  %v1619 = vpop.f32.mrf.mxu0
  %1620 = vmatprep.mubr.f32.mxu0 0.0
  %1621 = vmatmul.mubr.f32.gmra.mxu0 %v1217
  %v1622 = vpop.f32.mrf.mxu0
  %v1623 = vadd.f32 %v1239, %v1622
  %v1624 = vpop.f32.mrf.mxu0
  %1625 = vdwg.mxu0
  %v1626 = vmax.f32 %v1308, 0.0
  %v1627 = vmax.f32 %v1313, 0.0
  %v1628 = vmax.f32 %v1318, 0.0
  %v1629 = vmax.f32 %v1323, 0.0
  %v1630 = vmax.f32 %v1328, 0.0
  %v1631 = vmax.f32 %v1333, 0.0
  %v1632 = vmax.f32 %v1338, 0.0
  %v1633 = vmax.f32 %v1343, 0.0
  %v1634 = vmax.f32 %v1348, 0.0
  %v1635 = vmax.f32 %v1353, 0.0
  %v1636 = vmax.f32 %v1358, 0.0
  %v1637 = vmax.f32 %v1363, 0.0
  %v1638 = vmax.f32 %v1368, 0.0
  %v1639 = vmax.f32 %v1373, 0.0
  %v1640 = vmax.f32 %v1378, 0.0
  %v1641 = vmax.f32 %v1383, 0.0
  %v1642 = vmax.f32 %v1388, 0.0
  %v1643 = vmax.f32 %v1393, 0.0
  %v1644 = vmax.f32 %v1398, 0.0
  %v1645 = vmax.f32 %v1403, 0.0
  %v1646 = vmax.f32 %v1408, 0.0
  %v1647 = vmax.f32 %v1413, 0.0
  %v1648 = vmax.f32 %v1418, 0.0
  %v1649 = vmax.f32 %v1423, 0.0
  %v1650 = vmax.f32 %v1428, 0.0
  %v1651 = vmax.f32 %v1433, 0.0
  %v1652 = vmax.f32 %v1438, 0.0
  %v1653 = vmax.f32 %v1443, 0.0
  %v1654 = vmax.f32 %v1448, 0.0
  %v1655 = vmax.f32 %v1453, 0.0
  %v1656 = vmax.f32 %v1458, 0.0
  %v1657 = vmax.f32 %v1463, 0.0
  %v1658 = vmax.f32 %v1468, 0.0
  %v1659 = vmax.f32 %v1473, 0.0
  %v1660 = vmax.f32 %v1478, 0.0
  %v1661 = vmax.f32 %v1483, 0.0
  %v1662 = vmax.f32 %v1488, 0.0
  %v1663 = vmax.f32 %v1493, 0.0
  %v1664 = vmax.f32 %v1498, 0.0
  %v1665 = vmax.f32 %v1503, 0.0
  %v1666 = vmax.f32 %v1508, 0.0
  %v1667 = vmax.f32 %v1513, 0.0
  %v1668 = vmax.f32 %v1518, 0.0
  %v1669 = vmax.f32 %v1523, 0.0
  %v1670 = vmax.f32 %v1528, 0.0
  %v1671 = vmax.f32 %v1533, 0.0
  %v1672 = vmax.f32 %v1538, 0.0
  %v1673 = vmax.f32 %v1543, 0.0
  %v1674 = vmax.f32 %v1548, 0.0
  %v1675 = vmax.f32 %v1553, 0.0
  %v1676 = vmax.f32 %v1558, 0.0
  %v1677 = vmax.f32 %v1563, 0.0
  %v1678 = vmax.f32 %v1568, 0.0
  %v1679 = vmax.f32 %v1573, 0.0
  %v1680 = vmax.f32 %v1578, 0.0
  %v1681 = vmax.f32 %v1583, 0.0
  %v1682 = vmax.f32 %v1588, 0.0
  %v1683 = vmax.f32 %v1593, 0.0
  %v1684 = vmax.f32 %v1598, 0.0
  %v1685 = vmax.f32 %v1603, 0.0
  %v1686 = vmax.f32 %v1608, 0.0
  %v1687 = vmax.f32 %v1613, 0.0
  %v1688 = vmax.f32 %v1618, 0.0
  %v1689 = vmax.f32 %v1623, 0.0
  %v1690 = vld [vmem:[%s7] sm:$0xff]
  %v1691 = vld [vmem:[%s7 + $0x8] sm:$0xff]
  %v1692 = vld [vmem:[%s7 + $0x10] sm:$0xff]
  %v1693 = vld [vmem:[%s7 + $0x18] sm:$0xff]
  %v1694 = vld [vmem:[%s7 + $0x20] sm:$0xff]
  %v1695 = vld [vmem:[%s7 + $0x28] sm:$0xff]
  %v1696 = vld [vmem:[%s7 + $0x30] sm:$0xff]
  %v1697 = vld [vmem:[%s7 + $0x38] sm:$0xff]
  %v1698 = vld [vmem:[%s7 + $0x40] sm:$0xff]
  %v1699 = vld [vmem:[%s7 + $0x48] sm:$0xff]
  %v1700 = vld [vmem:[%s7 + $0x50] sm:$0xff]
  %v1701 = vld [vmem:[%s7 + $0x58] sm:$0xff]
  %v1702 = vld [vmem:[%s7 + $0x60] sm:$0xff]
  %v1703 = vld [vmem:[%s7 + $0x68] sm:$0xff]
  %v1704 = vld [vmem:[%s7 + $0x70] sm:$0xff]
  %v1705 = vld [vmem:[%s7 + $0x78] sm:$0xff]
  %1706 = vmatprep.subr.mxu0 0.0
  %1707 = vmatpush1.msra.mxu0 %v1705
  %1708 = vmatprep.subr.mxu0 0.0
  %1709 = vmatpush1.msra.mxu0 %v1704
  %1710 = vmatprep.subr.mxu0 0.0
  %1711 = vmatpush1.msra.mxu0 %v1703
  %1712 = vmatprep.subr.mxu0 0.0
  %1713 = vmatpush1.msra.mxu0 %v1702
  %1714 = vmatprep.subr.mxu0 0.0
  %1715 = vmatpush1.msra.mxu0 %v1701
  %1716 = vmatprep.subr.mxu0 0.0
  %1717 = vmatpush1.msra.mxu0 %v1700
  %1718 = vmatprep.subr.mxu0 0.0
  %1719 = vmatpush1.msra.mxu0 %v1699
  %1720 = vmatprep.subr.mxu0 0.0
  %1721 = vmatpush1.msra.mxu0 %v1698
  %1722 = vmatprep.subr.mxu0 0.0
  %1723 = vmatpush1.msra.mxu0 %v1697
  %1724 = vmatprep.subr.mxu0 0.0
  %1725 = vmatpush1.msra.mxu0 %v1696
  %1726 = vmatprep.subr.mxu0 0.0
  %1727 = vmatpush1.msra.mxu0 %v1695
  %1728 = vmatprep.subr.mxu0 0.0
  %1729 = vmatpush1.msra.mxu0 %v1694
  %1730 = vmatprep.subr.mxu0 0.0
  %1731 = vmatpush1.msra.mxu0 %v1693
  %1732 = vmatprep.subr.mxu0 0.0
  %1733 = vmatpush1.msra.mxu0 %v1692
  %1734 = vmatprep.subr.mxu0 0.0
  %1735 = vmatpush1.msra.mxu0 %v1691
  %1736 = vmatprep.subr.mxu0 0.0
  %1737 = vmatpush1.msra.mxu0 %v1690
  %1738 = vmatprep.subr.mxu0 0.0
  %1739 = vmatpush2.msra.mxu0 0.0
  %1740 = vmatprep.subr.mxu0 0.0
  %1741 = vmatpush2.msra.mxu0 0.0
  %1742 = vmatprep.subr.mxu0 0.0
  %1743 = vmatpush2.msra.mxu0 0.0
  %1744 = vmatprep.subr.mxu0 0.0
  %1745 = vmatpush2.msra.mxu0 0.0
  %1746 = vmatprep.subr.mxu0 0.0
  %1747 = vmatpush2.msra.mxu0 0.0
  %1748 = vmatprep.subr.mxu0 0.0
  %1749 = vmatpush2.msra.mxu0 0.0
  %1750 = vmatprep.subr.mxu0 0.0
  %1751 = vmatpush2.msra.mxu0 0.0
  %1752 = vmatprep.subr.mxu0 0.0
  %1753 = vmatpush2.msra.mxu0 0.0
  %1754 = vmatprep.subr.mxu0 0.0
  %1755 = vmatpush2.msra.mxu0 0.0
  %1756 = vmatprep.subr.mxu0 0.0
  %1757 = vmatpush2.msra.mxu0 0.0
  %1758 = vmatprep.subr.mxu0 0.0
  %1759 = vmatpush2.msra.mxu0 0.0
  %1760 = vmatprep.subr.mxu0 0.0
  %1761 = vmatpush2.msra.mxu0 0.0
  %1762 = vmatprep.subr.mxu0 0.0
  %1763 = vmatpush2.msra.mxu0 0.0
  %1764 = vmatprep.subr.mxu0 0.0
  %1765 = vmatpush2.msra.mxu0 0.0
  %1766 = vmatprep.subr.mxu0 0.0
  %1767 = vmatpush2.msra.mxu0 0.0
  %1768 = vmatprep.subr.mxu0 0.0
  %1769 = vmatpush2.msra.mxu0 0.0
  %1770 = vmatprep.mubr.f32.mxu0 0.0
  %1771 = vmatmul.mubr.f32.gmra.mxu0 %v1626
  %v1772 = vpop.f32.mrf.mxu0
  %v1773 = vadd.f32 0.0, %v1772
  %v1774 = vpop.f32.mrf.mxu0
  %1775 = vmatprep.mubr.f32.mxu0 0.0
  %1776 = vmatmul.mubr.f32.gmra.mxu0 %v1627
  %v1777 = vpop.f32.mrf.mxu0
  %v1778 = vadd.f32 0.0, %v1777
  %v1779 = vpop.f32.mrf.mxu0
  %1780 = vmatprep.mubr.f32.mxu0 0.0
  %1781 = vmatmul.mubr.f32.gmra.mxu0 %v1628
  %v1782 = vpop.f32.mrf.mxu0
  %v1783 = vadd.f32 0.0, %v1782
  %v1784 = vpop.f32.mrf.mxu0
  %1785 = vmatprep.mubr.f32.mxu0 0.0
  %1786 = vmatmul.mubr.f32.gmra.mxu0 %v1629
  %v1787 = vpop.f32.mrf.mxu0
  %v1788 = vadd.f32 0.0, %v1787
  %v1789 = vpop.f32.mrf.mxu0
  %1790 = vmatprep.mubr.f32.mxu0 0.0
  %1791 = vmatmul.mubr.f32.gmra.mxu0 %v1630
  %v1792 = vpop.f32.mrf.mxu0
  %v1793 = vadd.f32 0.0, %v1792
  %v1794 = vpop.f32.mrf.mxu0
  %1795 = vmatprep.mubr.f32.mxu0 0.0
  %1796 = vmatmul.mubr.f32.gmra.mxu0 %v1631
  %v1797 = vpop.f32.mrf.mxu0
  %v1798 = vadd.f32 0.0, %v1797
  %v1799 = vpop.f32.mrf.mxu0
  %1800 = vmatprep.mubr.f32.mxu0 0.0
  %1801 = vmatmul.mubr.f32.gmra.mxu0 %v1632
  %v1802 = vpop.f32.mrf.mxu0
  %v1803 = vadd.f32 0.0, %v1802
  %v1804 = vpop.f32.mrf.mxu0
  %1805 = vmatprep.mubr.f32.mxu0 0.0
  %1806 = vmatmul.mubr.f32.gmra.mxu0 %v1633
  %v1807 = vpop.f32.mrf.mxu0
  %v1808 = vadd.f32 0.0, %v1807
  %v1809 = vpop.f32.mrf.mxu0
  %1810 = vmatprep.mubr.f32.mxu0 0.0
  %1811 = vmatmul.mubr.f32.gmra.mxu0 %v1634
  %v1812 = vpop.f32.mrf.mxu0
  %v1813 = vadd.f32 0.0, %v1812
  %v1814 = vpop.f32.mrf.mxu0
  %1815 = vmatprep.mubr.f32.mxu0 0.0
  %1816 = vmatmul.mubr.f32.gmra.mxu0 %v1635
  %v1817 = vpop.f32.mrf.mxu0
  %v1818 = vadd.f32 0.0, %v1817
  %v1819 = vpop.f32.mrf.mxu0
  %1820 = vmatprep.mubr.f32.mxu0 0.0
  %1821 = vmatmul.mubr.f32.gmra.mxu0 %v1636
  %v1822 = vpop.f32.mrf.mxu0
  %v1823 = vadd.f32 0.0, %v1822
  %v1824 = vpop.f32.mrf.mxu0
  %1825 = vmatprep.mubr.f32.mxu0 0.0
  %1826 = vmatmul.mubr.f32.gmra.mxu0 %v1637
  %v1827 = vpop.f32.mrf.mxu0
  %v1828 = vadd.f32 0.0, %v1827
  %v1829 = vpop.f32.mrf.mxu0
  %1830 = vmatprep.mubr.f32.mxu0 0.0
  %1831 = vmatmul.mubr.f32.gmra.mxu0 %v1638
  %v1832 = vpop.f32.mrf.mxu0
  %v1833 = vadd.f32 0.0, %v1832
  %v1834 = vpop.f32.mrf.mxu0
  %1835 = vmatprep.mubr.f32.mxu0 0.0
  %1836 = vmatmul.mubr.f32.gmra.mxu0 %v1639
  %v1837 = vpop.f32.mrf.mxu0
  %v1838 = vadd.f32 0.0, %v1837
  %v1839 = vpop.f32.mrf.mxu0
  %1840 = vmatprep.mubr.f32.mxu0 0.0
  %1841 = vmatmul.mubr.f32.gmra.mxu0 %v1640
  %v1842 = vpop.f32.mrf.mxu0
  %v1843 = vadd.f32 0.0, %v1842
  %v1844 = vpop.f32.mrf.mxu0
  %1845 = vmatprep.mubr.f32.mxu0 0.0
  %1846 = vmatmul.mubr.f32.gmra.mxu0 %v1641
  %v1847 = vpop.f32.mrf.mxu0
  %v1848 = vadd.f32 0.0, %v1847
  %v1849 = vpop.f32.mrf.mxu0
  %1850 = vmatprep.mubr.f32.mxu0 0.0
  %1851 = vmatmul.mubr.f32.gmra.mxu0 %v1642
  %v1852 = vpop.f32.mrf.mxu0
  %v1853 = vadd.f32 0.0, %v1852
  %v1854 = vpop.f32.mrf.mxu0
  %1855 = vmatprep.mubr.f32.mxu0 0.0
  %1856 = vmatmul.mubr.f32.gmra.mxu0 %v1643
  %v1857 = vpop.f32.mrf.mxu0
  %v1858 = vadd.f32 0.0, %v1857
  %v1859 = vpop.f32.mrf.mxu0
  %1860 = vmatprep.mubr.f32.mxu0 0.0
  %1861 = vmatmul.mubr.f32.gmra.mxu0 %v1644
  %v1862 = vpop.f32.mrf.mxu0
  %v1863 = vadd.f32 0.0, %v1862
  %v1864 = vpop.f32.mrf.mxu0
  %1865 = vmatprep.mubr.f32.mxu0 0.0
  %1866 = vmatmul.mubr.f32.gmra.mxu0 %v1645
  %v1867 = vpop.f32.mrf.mxu0
  %v1868 = vadd.f32 0.0, %v1867
  %v1869 = vpop.f32.mrf.mxu0
  %1870 = vmatprep.mubr.f32.mxu0 0.0
  %1871 = vmatmul.mubr.f32.gmra.mxu0 %v1646
  %v1872 = vpop.f32.mrf.mxu0
  %v1873 = vadd.f32 0.0, %v1872
  %v1874 = vpop.f32.mrf.mxu0
  %1875 = vmatprep.mubr.f32.mxu0 0.0
  %1876 = vmatmul.mubr.f32.gmra.mxu0 %v1647
  %v1877 = vpop.f32.mrf.mxu0
  %v1878 = vadd.f32 0.0, %v1877
  %v1879 = vpop.f32.mrf.mxu0
  %1880 = vmatprep.mubr.f32.mxu0 0.0
  %1881 = vmatmul.mubr.f32.gmra.mxu0 %v1648
  %v1882 = vpop.f32.mrf.mxu0
  %v1883 = vadd.f32 0.0, %v1882
  %v1884 = vpop.f32.mrf.mxu0
  %1885 = vmatprep.mubr.f32.mxu0 0.0
  %1886 = vmatmul.mubr.f32.gmra.mxu0 %v1649
  %v1887 = vpop.f32.mrf.mxu0
  %v1888 = vadd.f32 0.0, %v1887
  %v1889 = vpop.f32.mrf.mxu0
  %1890 = vmatprep.mubr.f32.mxu0 0.0
  %1891 = vmatmul.mubr.f32.gmra.mxu0 %v1650
  %v1892 = vpop.f32.mrf.mxu0
  %v1893 = vadd.f32 0.0, %v1892
  %v1894 = vpop.f32.mrf.mxu0
  %1895 = vmatprep.mubr.f32.mxu0 0.0
  %1896 = vmatmul.mubr.f32.gmra.mxu0 %v1651
  %v1897 = vpop.f32.mrf.mxu0
  %v1898 = vadd.f32 0.0, %v1897
  %v1899 = vpop.f32.mrf.mxu0
  %1900 = vmatprep.mubr.f32.mxu0 0.0
  %1901 = vmatmul.mubr.f32.gmra.mxu0 %v1652
  %v1902 = vpop.f32.mrf.mxu0
  %v1903 = vadd.f32 0.0, %v1902
  %v1904 = vpop.f32.mrf.mxu0
  %1905 = vmatprep.mubr.f32.mxu0 0.0
  %1906 = vmatmul.mubr.f32.gmra.mxu0 %v1653
  %v1907 = vpop.f32.mrf.mxu0
  %v1908 = vadd.f32 0.0, %v1907
  %v1909 = vpop.f32.mrf.mxu0
  %1910 = vmatprep.mubr.f32.mxu0 0.0
  %1911 = vmatmul.mubr.f32.gmra.mxu0 %v1654
  %v1912 = vpop.f32.mrf.mxu0
  %v1913 = vadd.f32 0.0, %v1912
  %v1914 = vpop.f32.mrf.mxu0
  %1915 = vmatprep.mubr.f32.mxu0 0.0
  %1916 = vmatmul.mubr.f32.gmra.mxu0 %v1655
  %v1917 = vpop.f32.mrf.mxu0
  %v1918 = vadd.f32 0.0, %v1917
  %v1919 = vpop.f32.mrf.mxu0
  %1920 = vmatprep.mubr.f32.mxu0 0.0
  %1921 = vmatmul.mubr.f32.gmra.mxu0 %v1656
  %v1922 = vpop.f32.mrf.mxu0
  %v1923 = vadd.f32 0.0, %v1922
  %v1924 = vpop.f32.mrf.mxu0
  %1925 = vmatprep.mubr.f32.mxu0 0.0
  %1926 = vmatmul.mubr.f32.gmra.mxu0 %v1657
  %v1927 = vpop.f32.mrf.mxu0
  %v1928 = vadd.f32 0.0, %v1927
  %v1929 = vpop.f32.mrf.mxu0
  %1930 = vmatprep.mubr.f32.mxu0 0.0
  %1931 = vmatmul.mubr.f32.gmra.mxu0 %v1658
  %v1932 = vpop.f32.mrf.mxu0
  %v1933 = vadd.f32 0.0, %v1932
  %v1934 = vpop.f32.mrf.mxu0
  %1935 = vmatprep.mubr.f32.mxu0 0.0
  %1936 = vmatmul.mubr.f32.gmra.mxu0 %v1659
  %v1937 = vpop.f32.mrf.mxu0
  %v1938 = vadd.f32 0.0, %v1937
  %v1939 = vpop.f32.mrf.mxu0
  %1940 = vmatprep.mubr.f32.mxu0 0.0
  %1941 = vmatmul.mubr.f32.gmra.mxu0 %v1660
  %v1942 = vpop.f32.mrf.mxu0
  %v1943 = vadd.f32 0.0, %v1942
  %v1944 = vpop.f32.mrf.mxu0
  %1945 = vmatprep.mubr.f32.mxu0 0.0
  %1946 = vmatmul.mubr.f32.gmra.mxu0 %v1661
  %v1947 = vpop.f32.mrf.mxu0
  %v1948 = vadd.f32 0.0, %v1947
  %v1949 = vpop.f32.mrf.mxu0
  %1950 = vmatprep.mubr.f32.mxu0 0.0
  %1951 = vmatmul.mubr.f32.gmra.mxu0 %v1662
  %v1952 = vpop.f32.mrf.mxu0
  %v1953 = vadd.f32 0.0, %v1952
  %v1954 = vpop.f32.mrf.mxu0
  %1955 = vmatprep.mubr.f32.mxu0 0.0
  %1956 = vmatmul.mubr.f32.gmra.mxu0 %v1663
  %v1957 = vpop.f32.mrf.mxu0
  %v1958 = vadd.f32 0.0, %v1957
  %v1959 = vpop.f32.mrf.mxu0
  %1960 = vmatprep.mubr.f32.mxu0 0.0
  %1961 = vmatmul.mubr.f32.gmra.mxu0 %v1664
  %v1962 = vpop.f32.mrf.mxu0
  %v1963 = vadd.f32 0.0, %v1962
  %v1964 = vpop.f32.mrf.mxu0
  %1965 = vmatprep.mubr.f32.mxu0 0.0
  %1966 = vmatmul.mubr.f32.gmra.mxu0 %v1665
  %v1967 = vpop.f32.mrf.mxu0
  %v1968 = vadd.f32 0.0, %v1967
  %v1969 = vpop.f32.mrf.mxu0
  %1970 = vmatprep.mubr.f32.mxu0 0.0
  %1971 = vmatmul.mubr.f32.gmra.mxu0 %v1666
  %v1972 = vpop.f32.mrf.mxu0
  %v1973 = vadd.f32 0.0, %v1972
  %v1974 = vpop.f32.mrf.mxu0
  %1975 = vmatprep.mubr.f32.mxu0 0.0
  %1976 = vmatmul.mubr.f32.gmra.mxu0 %v1667
  %v1977 = vpop.f32.mrf.mxu0
  %v1978 = vadd.f32 0.0, %v1977
  %v1979 = vpop.f32.mrf.mxu0
  %1980 = vmatprep.mubr.f32.mxu0 0.0
  %1981 = vmatmul.mubr.f32.gmra.mxu0 %v1668
  %v1982 = vpop.f32.mrf.mxu0
  %v1983 = vadd.f32 0.0, %v1982
  %v1984 = vpop.f32.mrf.mxu0
  %1985 = vmatprep.mubr.f32.mxu0 0.0
  %1986 = vmatmul.mubr.f32.gmra.mxu0 %v1669
  %v1987 = vpop.f32.mrf.mxu0
  %v1988 = vadd.f32 0.0, %v1987
  %v1989 = vpop.f32.mrf.mxu0
  %1990 = vmatprep.mubr.f32.mxu0 0.0
  %1991 = vmatmul.mubr.f32.gmra.mxu0 %v1670
  %v1992 = vpop.f32.mrf.mxu0
  %v1993 = vadd.f32 0.0, %v1992
  %v1994 = vpop.f32.mrf.mxu0
  %1995 = vmatprep.mubr.f32.mxu0 0.0
  %1996 = vmatmul.mubr.f32.gmra.mxu0 %v1671
  %v1997 = vpop.f32.mrf.mxu0
  %v1998 = vadd.f32 0.0, %v1997
  %v1999 = vpop.f32.mrf.mxu0
  %2000 = vmatprep.mubr.f32.mxu0 0.0
  %2001 = vmatmul.mubr.f32.gmra.mxu0 %v1672
  %v2002 = vpop.f32.mrf.mxu0
  %v2003 = vadd.f32 0.0, %v2002
  %v2004 = vpop.f32.mrf.mxu0
  %2005 = vmatprep.mubr.f32.mxu0 0.0
  %2006 = vmatmul.mubr.f32.gmra.mxu0 %v1673
  %v2007 = vpop.f32.mrf.mxu0
  %v2008 = vadd.f32 0.0, %v2007
  %v2009 = vpop.f32.mrf.mxu0
  %2010 = vmatprep.mubr.f32.mxu0 0.0
  %2011 = vmatmul.mubr.f32.gmra.mxu0 %v1674
  %v2012 = vpop.f32.mrf.mxu0
  %v2013 = vadd.f32 0.0, %v2012
  %v2014 = vpop.f32.mrf.mxu0
  %2015 = vmatprep.mubr.f32.mxu0 0.0
  %2016 = vmatmul.mubr.f32.gmra.mxu0 %v1675
  %v2017 = vpop.f32.mrf.mxu0
  %v2018 = vadd.f32 0.0, %v2017
  %v2019 = vpop.f32.mrf.mxu0
  %2020 = vmatprep.mubr.f32.mxu0 0.0
  %2021 = vmatmul.mubr.f32.gmra.mxu0 %v1676
  %v2022 = vpop.f32.mrf.mxu0
  %v2023 = vadd.f32 0.0, %v2022
  %v2024 = vpop.f32.mrf.mxu0
  %2025 = vmatprep.mubr.f32.mxu0 0.0
  %2026 = vmatmul.mubr.f32.gmra.mxu0 %v1677
  %v2027 = vpop.f32.mrf.mxu0
  %v2028 = vadd.f32 0.0, %v2027
  %v2029 = vpop.f32.mrf.mxu0
  %2030 = vmatprep.mubr.f32.mxu0 0.0
  %2031 = vmatmul.mubr.f32.gmra.mxu0 %v1678
  %v2032 = vpop.f32.mrf.mxu0
  %v2033 = vadd.f32 0.0, %v2032
  %v2034 = vpop.f32.mrf.mxu0
  %2035 = vmatprep.mubr.f32.mxu0 0.0
  %2036 = vmatmul.mubr.f32.gmra.mxu0 %v1679
  %v2037 = vpop.f32.mrf.mxu0
  %v2038 = vadd.f32 0.0, %v2037
  %v2039 = vpop.f32.mrf.mxu0
  %2040 = vmatprep.mubr.f32.mxu0 0.0
  %2041 = vmatmul.mubr.f32.gmra.mxu0 %v1680
  %v2042 = vpop.f32.mrf.mxu0
  %v2043 = vadd.f32 0.0, %v2042
  %v2044 = vpop.f32.mrf.mxu0
  %2045 = vmatprep.mubr.f32.mxu0 0.0
  %2046 = vmatmul.mubr.f32.gmra.mxu0 %v1681
  %v2047 = vpop.f32.mrf.mxu0
  %v2048 = vadd.f32 0.0, %v2047
  %v2049 = vpop.f32.mrf.mxu0
  %2050 = vmatprep.mubr.f32.mxu0 0.0
  %2051 = vmatmul.mubr.f32.gmra.mxu0 %v1682
  %v2052 = vpop.f32.mrf.mxu0
  %v2053 = vadd.f32 0.0, %v2052
  %v2054 = vpop.f32.mrf.mxu0
  %2055 = vmatprep.mubr.f32.mxu0 0.0
  %2056 = vmatmul.mubr.f32.gmra.mxu0 %v1683
  %v2057 = vpop.f32.mrf.mxu0
  %v2058 = vadd.f32 0.0, %v2057
  %v2059 = vpop.f32.mrf.mxu0
  %2060 = vmatprep.mubr.f32.mxu0 0.0
  %2061 = vmatmul.mubr.f32.gmra.mxu0 %v1684
  %v2062 = vpop.f32.mrf.mxu0
  %v2063 = vadd.f32 0.0, %v2062
  %v2064 = vpop.f32.mrf.mxu0
  %2065 = vmatprep.mubr.f32.mxu0 0.0
  %2066 = vmatmul.mubr.f32.gmra.mxu0 %v1685
  %v2067 = vpop.f32.mrf.mxu0
  %v2068 = vadd.f32 0.0, %v2067
  %v2069 = vpop.f32.mrf.mxu0
  %2070 = vmatprep.mubr.f32.mxu0 0.0
  %2071 = vmatmul.mubr.f32.gmra.mxu0 %v1686
  %v2072 = vpop.f32.mrf.mxu0
  %v2073 = vadd.f32 0.0, %v2072
  %v2074 = vpop.f32.mrf.mxu0
  %2075 = vmatprep.mubr.f32.mxu0 0.0
  %2076 = vmatmul.mubr.f32.gmra.mxu0 %v1687
  %v2077 = vpop.f32.mrf.mxu0
  %v2078 = vadd.f32 0.0, %v2077
  %v2079 = vpop.f32.mrf.mxu0
  %2080 = vmatprep.mubr.f32.mxu0 0.0
  %2081 = vmatmul.mubr.f32.gmra.mxu0 %v1688
  %v2082 = vpop.f32.mrf.mxu0
  %v2083 = vadd.f32 0.0, %v2082
  %v2084 = vpop.f32.mrf.mxu0
  %2085 = vmatprep.mubr.f32.mxu0 0.0
  %2086 = vmatmul.mubr.f32.gmra.mxu0 %v1689
  %v2087 = vpop.f32.mrf.mxu0
  %v2088 = vadd.f32 0.0, %v2087
  %v2089 = vpop.f32.mrf.mxu0
  %2090 = vdwg.mxu0
  %v2091 = vld [vmem:[%s8] sm:$0x1]
  %v2093 = vlaneseq
  %v2094 = vshrl.u32 %v2093, 7
  %v2095 = vsub.s32 0, %v2094
  %v2096 = vrot.slane %v2091, %v2095
  %v2098 = vadd.f32 %v1773, %v2096
  %v2099 = vadd.f32 %v1778, %v2096
  %v2100 = vadd.f32 %v1783, %v2096
  %v2101 = vadd.f32 %v1788, %v2096
  %v2102 = vadd.f32 %v1793, %v2096
  %v2103 = vadd.f32 %v1798, %v2096
  %v2104 = vadd.f32 %v1803, %v2096
  %v2105 = vadd.f32 %v1808, %v2096
  %v2106 = vadd.f32 %v1813, %v2096
  %v2107 = vadd.f32 %v1818, %v2096
  %v2108 = vadd.f32 %v1823, %v2096
  %v2109 = vadd.f32 %v1828, %v2096
  %v2110 = vadd.f32 %v1833, %v2096
  %v2111 = vadd.f32 %v1838, %v2096
  %v2112 = vadd.f32 %v1843, %v2096
  %v2113 = vadd.f32 %v1848, %v2096
  %v2114 = vadd.f32 %v1853, %v2096
  %v2115 = vadd.f32 %v1858, %v2096
  %v2116 = vadd.f32 %v1863, %v2096
  %v2117 = vadd.f32 %v1868, %v2096
  %v2118 = vadd.f32 %v1873, %v2096
  %v2119 = vadd.f32 %v1878, %v2096
  %v2120 = vadd.f32 %v1883, %v2096
  %v2121 = vadd.f32 %v1888, %v2096
  %v2122 = vadd.f32 %v1893, %v2096
  %v2123 = vadd.f32 %v1898, %v2096
  %v2124 = vadd.f32 %v1903, %v2096
  %v2125 = vadd.f32 %v1908, %v2096
  %v2126 = vadd.f32 %v1913, %v2096
  %v2127 = vadd.f32 %v1918, %v2096
  %v2128 = vadd.f32 %v1923, %v2096
  %v2129 = vadd.f32 %v1928, %v2096
  %v2130 = vadd.f32 %v1933, %v2096
  %v2131 = vadd.f32 %v1938, %v2096
  %v2132 = vadd.f32 %v1943, %v2096
  %v2133 = vadd.f32 %v1948, %v2096
  %v2134 = vadd.f32 %v1953, %v2096
  %v2135 = vadd.f32 %v1958, %v2096
  %v2136 = vadd.f32 %v1963, %v2096
  %v2137 = vadd.f32 %v1968, %v2096
  %v2138 = vadd.f32 %v1973, %v2096
  %v2139 = vadd.f32 %v1978, %v2096
  %v2140 = vadd.f32 %v1983, %v2096
  %v2141 = vadd.f32 %v1988, %v2096
  %v2142 = vadd.f32 %v1993, %v2096
  %v2143 = vadd.f32 %v1998, %v2096
  %v2144 = vadd.f32 %v2003, %v2096
  %v2145 = vadd.f32 %v2008, %v2096
  %v2146 = vadd.f32 %v2013, %v2096
  %v2147 = vadd.f32 %v2018, %v2096
  %v2148 = vadd.f32 %v2023, %v2096
  %v2149 = vadd.f32 %v2028, %v2096
  %v2150 = vadd.f32 %v2033, %v2096
  %v2151 = vadd.f32 %v2038, %v2096
  %v2152 = vadd.f32 %v2043, %v2096
  %v2153 = vadd.f32 %v2048, %v2096
  %v2154 = vadd.f32 %v2053, %v2096
  %v2155 = vadd.f32 %v2058, %v2096
  %v2156 = vadd.f32 %v2063, %v2096
  %v2157 = vadd.f32 %v2068, %v2096
  %v2158 = vadd.f32 %v2073, %v2096
  %v2159 = vadd.f32 %v2078, %v2096
  %v2160 = vadd.f32 %v2083, %v2096
  %v2161 = vadd.f32 %v2088, %v2096
  %v2162 = vxor.u32 %v2098, 2147483648
  %v2163 = vxor.u32 %v2099, 2147483648
  %v2164 = vxor.u32 %v2100, 2147483648
  %v2165 = vxor.u32 %v2101, 2147483648
  %v2166 = vxor.u32 %v2102, 2147483648
  %v2167 = vxor.u32 %v2103, 2147483648
  %v2168 = vxor.u32 %v2104, 2147483648
  %v2169 = vxor.u32 %v2105, 2147483648
  %v2170 = vxor.u32 %v2106, 2147483648
  %v2171 = vxor.u32 %v2107, 2147483648
  %v2172 = vxor.u32 %v2108, 2147483648
  %v2173 = vxor.u32 %v2109, 2147483648
  %v2174 = vxor.u32 %v2110, 2147483648
  %v2175 = vxor.u32 %v2111, 2147483648
  %v2176 = vxor.u32 %v2112, 2147483648
  %v2177 = vxor.u32 %v2113, 2147483648
  %v2178 = vxor.u32 %v2114, 2147483648
  %v2179 = vxor.u32 %v2115, 2147483648
  %v2180 = vxor.u32 %v2116, 2147483648
  %v2181 = vxor.u32 %v2117, 2147483648
  %v2182 = vxor.u32 %v2118, 2147483648
  %v2183 = vxor.u32 %v2119, 2147483648
  %v2184 = vxor.u32 %v2120, 2147483648
  %v2185 = vxor.u32 %v2121, 2147483648
  %v2186 = vxor.u32 %v2122, 2147483648
  %v2187 = vxor.u32 %v2123, 2147483648
  %v2188 = vxor.u32 %v2124, 2147483648
  %v2189 = vxor.u32 %v2125, 2147483648
  %v2190 = vxor.u32 %v2126, 2147483648
  %v2191 = vxor.u32 %v2127, 2147483648
  %v2192 = vxor.u32 %v2128, 2147483648
  %v2193 = vxor.u32 %v2129, 2147483648
  %v2194 = vxor.u32 %v2130, 2147483648
  %v2195 = vxor.u32 %v2131, 2147483648
  %v2196 = vxor.u32 %v2132, 2147483648
  %v2197 = vxor.u32 %v2133, 2147483648
  %v2198 = vxor.u32 %v2134, 2147483648
  %v2199 = vxor.u32 %v2135, 2147483648
  %v2200 = vxor.u32 %v2136, 2147483648
  %v2201 = vxor.u32 %v2137, 2147483648
  %v2202 = vxor.u32 %v2138, 2147483648
  %v2203 = vxor.u32 %v2139, 2147483648
  %v2204 = vxor.u32 %v2140, 2147483648
  %v2205 = vxor.u32 %v2141, 2147483648
  %v2206 = vxor.u32 %v2142, 2147483648
  %v2207 = vxor.u32 %v2143, 2147483648
  %v2208 = vxor.u32 %v2144, 2147483648
  %v2209 = vxor.u32 %v2145, 2147483648
  %v2210 = vxor.u32 %v2146, 2147483648
  %v2211 = vxor.u32 %v2147, 2147483648
  %v2212 = vxor.u32 %v2148, 2147483648
  %v2213 = vxor.u32 %v2149, 2147483648
  %v2214 = vxor.u32 %v2150, 2147483648
  %v2215 = vxor.u32 %v2151, 2147483648
  %v2216 = vxor.u32 %v2152, 2147483648
  %v2217 = vxor.u32 %v2153, 2147483648
  %v2218 = vxor.u32 %v2154, 2147483648
  %v2219 = vxor.u32 %v2155, 2147483648
  %v2220 = vxor.u32 %v2156, 2147483648
  %v2221 = vxor.u32 %v2157, 2147483648
  %v2222 = vxor.u32 %v2158, 2147483648
  %v2223 = vxor.u32 %v2159, 2147483648
  %v2224 = vxor.u32 %v2160, 2147483648
  %v2225 = vxor.u32 %v2161, 2147483648
  %v2226 = vmul.f32 %v2162, 1.442695
  %v2227 = vpow.pop %v2226
  %v2228 = vmul.f32 %v2163, 1.442695
  %v2229 = vpow.pop %v2228
  %v2230 = vmul.f32 %v2164, 1.442695
  %v2231 = vpow.pop %v2230
  %v2232 = vmul.f32 %v2165, 1.442695
  %v2233 = vpow.pop %v2232
  %v2234 = vmul.f32 %v2166, 1.442695
  %v2235 = vpow.pop %v2234
  %v2236 = vmul.f32 %v2167, 1.442695
  %v2237 = vpow.pop %v2236
  %v2238 = vmul.f32 %v2168, 1.442695
  %v2239 = vpow.pop %v2238
  %v2240 = vmul.f32 %v2169, 1.442695
  %v2241 = vpow.pop %v2240
  %v2242 = vmul.f32 %v2170, 1.442695
  %v2243 = vpow.pop %v2242
  %v2244 = vmul.f32 %v2171, 1.442695
  %v2245 = vpow.pop %v2244
  %v2246 = vmul.f32 %v2172, 1.442695
  %v2247 = vpow.pop %v2246
  %v2248 = vmul.f32 %v2173, 1.442695
  %v2249 = vpow.pop %v2248
  %v2250 = vmul.f32 %v2174, 1.442695
  %v2251 = vpow.pop %v2250
  %v2252 = vmul.f32 %v2175, 1.442695
  %v2253 = vpow.pop %v2252
  %v2254 = vmul.f32 %v2176, 1.442695
  %v2255 = vpow.pop %v2254
  %v2256 = vmul.f32 %v2177, 1.442695
  %v2257 = vpow.pop %v2256
  %v2258 = vmul.f32 %v2178, 1.442695
  %v2259 = vpow.pop %v2258
  %v2260 = vmul.f32 %v2179, 1.442695
  %v2261 = vpow.pop %v2260
  %v2262 = vmul.f32 %v2180, 1.442695
  %v2263 = vpow.pop %v2262
  %v2264 = vmul.f32 %v2181, 1.442695
  %v2265 = vpow.pop %v2264
  %v2266 = vmul.f32 %v2182, 1.442695
  %v2267 = vpow.pop %v2266
  %v2268 = vmul.f32 %v2183, 1.442695
  %v2269 = vpow.pop %v2268
  %v2270 = vmul.f32 %v2184, 1.442695
  %v2271 = vpow.pop %v2270
  %v2272 = vmul.f32 %v2185, 1.442695
  %v2273 = vpow.pop %v2272
  %v2274 = vmul.f32 %v2186, 1.442695
  %v2275 = vpow.pop %v2274
  %v2276 = vmul.f32 %v2187, 1.442695
  %v2277 = vpow.pop %v2276
  %v2278 = vmul.f32 %v2188, 1.442695
  %v2279 = vpow.pop %v2278
  %v2280 = vmul.f32 %v2189, 1.442695
  %v2281 = vpow.pop %v2280
  %v2282 = vmul.f32 %v2190, 1.442695
  %v2283 = vpow.pop %v2282
  %v2284 = vmul.f32 %v2191, 1.442695
  %v2285 = vpow.pop %v2284
  %v2286 = vmul.f32 %v2192, 1.442695
  %v2287 = vpow.pop %v2286
  %v2288 = vmul.f32 %v2193, 1.442695
  %v2289 = vpow.pop %v2288
  %v2290 = vmul.f32 %v2194, 1.442695
  %v2291 = vpow.pop %v2290
  %v2292 = vmul.f32 %v2195, 1.442695
  %v2293 = vpow.pop %v2292
  %v2294 = vmul.f32 %v2196, 1.442695
  %v2295 = vpow.pop %v2294
  %v2296 = vmul.f32 %v2197, 1.442695
  %v2297 = vpow.pop %v2296
  %v2298 = vmul.f32 %v2198, 1.442695
  %v2299 = vpow.pop %v2298
  %v2300 = vmul.f32 %v2199, 1.442695
  %v2301 = vpow.pop %v2300
  %v2302 = vmul.f32 %v2200, 1.442695
  %v2303 = vpow.pop %v2302
  %v2304 = vmul.f32 %v2201, 1.442695
  %v2305 = vpow.pop %v2304
  %v2306 = vmul.f32 %v2202, 1.442695
  %v2307 = vpow.pop %v2306
  %v2308 = vmul.f32 %v2203, 1.442695
  %v2309 = vpow.pop %v2308
  %v2310 = vmul.f32 %v2204, 1.442695
  %v2311 = vpow.pop %v2310
  %v2312 = vmul.f32 %v2205, 1.442695
  %v2313 = vpow.pop %v2312
  %v2314 = vmul.f32 %v2206, 1.442695
  %v2315 = vpow.pop %v2314
  %v2316 = vmul.f32 %v2207, 1.442695
  %v2317 = vpow.pop %v2316
  %v2318 = vmul.f32 %v2208, 1.442695
  %v2319 = vpow.pop %v2318
  %v2320 = vmul.f32 %v2209, 1.442695
  %v2321 = vpow.pop %v2320
  %v2322 = vmul.f32 %v2210, 1.442695
  %v2323 = vpow.pop %v2322
  %v2324 = vmul.f32 %v2211, 1.442695
  %v2325 = vpow.pop %v2324
  %v2326 = vmul.f32 %v2212, 1.442695
  %v2327 = vpow.pop %v2326
  %v2328 = vmul.f32 %v2213, 1.442695
  %v2329 = vpow.pop %v2328
  %v2330 = vmul.f32 %v2214, 1.442695
  %v2331 = vpow.pop %v2330
  %v2332 = vmul.f32 %v2215, 1.442695
  %v2333 = vpow.pop %v2332
  %v2334 = vmul.f32 %v2216, 1.442695
  %v2335 = vpow.pop %v2334
  %v2336 = vmul.f32 %v2217, 1.442695
  %v2337 = vpow.pop %v2336
  %v2338 = vmul.f32 %v2218, 1.442695
  %v2339 = vpow.pop %v2338
  %v2340 = vmul.f32 %v2219, 1.442695
  %v2341 = vpow.pop %v2340
  %v2342 = vmul.f32 %v2220, 1.442695
  %v2343 = vpow.pop %v2342
  %v2344 = vmul.f32 %v2221, 1.442695
  %v2345 = vpow.pop %v2344
  %v2346 = vmul.f32 %v2222, 1.442695
  %v2347 = vpow.pop %v2346
  %v2348 = vmul.f32 %v2223, 1.442695
  %v2349 = vpow.pop %v2348
  %v2350 = vmul.f32 %v2224, 1.442695
  %v2351 = vpow.pop %v2350
  %v2352 = vmul.f32 %v2225, 1.442695
  %v2353 = vpow.pop %v2352
  %v2354 = vadd.f32 %v2227, 1.0
  %v2355 = vadd.f32 %v2229, 1.0
  %v2356 = vadd.f32 %v2231, 1.0
  %v2357 = vadd.f32 %v2233, 1.0
  %v2358 = vadd.f32 %v2235, 1.0
  %v2359 = vadd.f32 %v2237, 1.0
  %v2360 = vadd.f32 %v2239, 1.0
  %v2361 = vadd.f32 %v2241, 1.0
  %v2362 = vadd.f32 %v2243, 1.0
  %v2363 = vadd.f32 %v2245, 1.0
  %v2364 = vadd.f32 %v2247, 1.0
  %v2365 = vadd.f32 %v2249, 1.0
  %v2366 = vadd.f32 %v2251, 1.0
  %v2367 = vadd.f32 %v2253, 1.0
  %v2368 = vadd.f32 %v2255, 1.0
  %v2369 = vadd.f32 %v2257, 1.0
  %v2370 = vadd.f32 %v2259, 1.0
  %v2371 = vadd.f32 %v2261, 1.0
  %v2372 = vadd.f32 %v2263, 1.0
  %v2373 = vadd.f32 %v2265, 1.0
  %v2374 = vadd.f32 %v2267, 1.0
  %v2375 = vadd.f32 %v2269, 1.0
  %v2376 = vadd.f32 %v2271, 1.0
  %v2377 = vadd.f32 %v2273, 1.0
  %v2378 = vadd.f32 %v2275, 1.0
  %v2379 = vadd.f32 %v2277, 1.0
  %v2380 = vadd.f32 %v2279, 1.0
  %v2381 = vadd.f32 %v2281, 1.0
  %v2382 = vadd.f32 %v2283, 1.0
  %v2383 = vadd.f32 %v2285, 1.0
  %v2384 = vadd.f32 %v2287, 1.0
  %v2385 = vadd.f32 %v2289, 1.0
  %v2386 = vadd.f32 %v2291, 1.0
  %v2387 = vadd.f32 %v2293, 1.0
  %v2388 = vadd.f32 %v2295, 1.0
  %v2389 = vadd.f32 %v2297, 1.0
  %v2390 = vadd.f32 %v2299, 1.0
  %v2391 = vadd.f32 %v2301, 1.0
  %v2392 = vadd.f32 %v2303, 1.0
  %v2393 = vadd.f32 %v2305, 1.0
  %v2394 = vadd.f32 %v2307, 1.0
  %v2395 = vadd.f32 %v2309, 1.0
  %v2396 = vadd.f32 %v2311, 1.0
  %v2397 = vadd.f32 %v2313, 1.0
  %v2398 = vadd.f32 %v2315, 1.0
  %v2399 = vadd.f32 %v2317, 1.0
  %v2400 = vadd.f32 %v2319, 1.0
  %v2401 = vadd.f32 %v2321, 1.0
  %v2402 = vadd.f32 %v2323, 1.0
  %v2403 = vadd.f32 %v2325, 1.0
  %v2404 = vadd.f32 %v2327, 1.0
  %v2405 = vadd.f32 %v2329, 1.0
  %v2406 = vadd.f32 %v2331, 1.0
  %v2407 = vadd.f32 %v2333, 1.0
  %v2408 = vadd.f32 %v2335, 1.0
  %v2409 = vadd.f32 %v2337, 1.0
  %v2410 = vadd.f32 %v2339, 1.0
  %v2411 = vadd.f32 %v2341, 1.0
  %v2412 = vadd.f32 %v2343, 1.0
  %v2413 = vadd.f32 %v2345, 1.0
  %v2414 = vadd.f32 %v2347, 1.0
  %v2415 = vadd.f32 %v2349, 1.0
  %v2416 = vadd.f32 %v2351, 1.0
  %v2417 = vadd.f32 %v2353, 1.0
  %v2418 = vrcp.pop %v2354
  %v2419 = vmul.f32 1.0, %v2418
  %v2420 = vrcp.pop %v2355
  %v2421 = vmul.f32 1.0, %v2420
  %v2422 = vrcp.pop %v2356
  %v2423 = vmul.f32 1.0, %v2422
  %v2424 = vrcp.pop %v2357
  %v2425 = vmul.f32 1.0, %v2424
  %v2426 = vrcp.pop %v2358
  %v2427 = vmul.f32 1.0, %v2426
  %v2428 = vrcp.pop %v2359
  %v2429 = vmul.f32 1.0, %v2428
  %v2430 = vrcp.pop %v2360
  %v2431 = vmul.f32 1.0, %v2430
  %v2432 = vrcp.pop %v2361
  %v2433 = vmul.f32 1.0, %v2432
  %v2434 = vrcp.pop %v2362
  %v2435 = vmul.f32 1.0, %v2434
  %v2436 = vrcp.pop %v2363
  %v2437 = vmul.f32 1.0, %v2436
  %v2438 = vrcp.pop %v2364
  %v2439 = vmul.f32 1.0, %v2438
  %v2440 = vrcp.pop %v2365
  %v2441 = vmul.f32 1.0, %v2440
  %v2442 = vrcp.pop %v2366
  %v2443 = vmul.f32 1.0, %v2442
  %v2444 = vrcp.pop %v2367
  %v2445 = vmul.f32 1.0, %v2444
  %v2446 = vrcp.pop %v2368
  %v2447 = vmul.f32 1.0, %v2446
  %v2448 = vrcp.pop %v2369
  %v2449 = vmul.f32 1.0, %v2448
  %v2450 = vrcp.pop %v2370
  %v2451 = vmul.f32 1.0, %v2450
  %v2452 = vrcp.pop %v2371
  %v2453 = vmul.f32 1.0, %v2452
  %v2454 = vrcp.pop %v2372
  %v2455 = vmul.f32 1.0, %v2454
  %v2456 = vrcp.pop %v2373
  %v2457 = vmul.f32 1.0, %v2456
  %v2458 = vrcp.pop %v2374
  %v2459 = vmul.f32 1.0, %v2458
  %v2460 = vrcp.pop %v2375
  %v2461 = vmul.f32 1.0, %v2460
  %v2462 = vrcp.pop %v2376
  %v2463 = vmul.f32 1.0, %v2462
  %v2464 = vrcp.pop %v2377
  %v2465 = vmul.f32 1.0, %v2464
  %v2466 = vrcp.pop %v2378
  %v2467 = vmul.f32 1.0, %v2466
  %v2468 = vrcp.pop %v2379
  %v2469 = vmul.f32 1.0, %v2468
  %v2470 = vrcp.pop %v2380
  %v2471 = vmul.f32 1.0, %v2470
  %v2472 = vrcp.pop %v2381
  %v2473 = vmul.f32 1.0, %v2472
  %v2474 = vrcp.pop %v2382
  %v2475 = vmul.f32 1.0, %v2474
  %v2476 = vrcp.pop %v2383
  %v2477 = vmul.f32 1.0, %v2476
  %v2478 = vrcp.pop %v2384
  %v2479 = vmul.f32 1.0, %v2478
  %v2480 = vrcp.pop %v2385
  %v2481 = vmul.f32 1.0, %v2480
  %v2482 = vrcp.pop %v2386
  %v2483 = vmul.f32 1.0, %v2482
  %v2484 = vrcp.pop %v2387
  %v2485 = vmul.f32 1.0, %v2484
  %v2486 = vrcp.pop %v2388
  %v2487 = vmul.f32 1.0, %v2486
  %v2488 = vrcp.pop %v2389
  %v2489 = vmul.f32 1.0, %v2488
  %v2490 = vrcp.pop %v2390
  %v2491 = vmul.f32 1.0, %v2490
  %v2492 = vrcp.pop %v2391
  %v2493 = vmul.f32 1.0, %v2492
  %v2494 = vrcp.pop %v2392
  %v2495 = vmul.f32 1.0, %v2494
  %v2496 = vrcp.pop %v2393
  %v2497 = vmul.f32 1.0, %v2496
  %v2498 = vrcp.pop %v2394
  %v2499 = vmul.f32 1.0, %v2498
  %v2500 = vrcp.pop %v2395
  %v2501 = vmul.f32 1.0, %v2500
  %v2502 = vrcp.pop %v2396
  %v2503 = vmul.f32 1.0, %v2502
  %v2504 = vrcp.pop %v2397
  %v2505 = vmul.f32 1.0, %v2504
  %v2506 = vrcp.pop %v2398
  %v2507 = vmul.f32 1.0, %v2506
  %v2508 = vrcp.pop %v2399
  %v2509 = vmul.f32 1.0, %v2508
  %v2510 = vrcp.pop %v2400
  %v2511 = vmul.f32 1.0, %v2510
  %v2512 = vrcp.pop %v2401
  %v2513 = vmul.f32 1.0, %v2512
  %v2514 = vrcp.pop %v2402
  %v2515 = vmul.f32 1.0, %v2514
  %v2516 = vrcp.pop %v2403
  %v2517 = vmul.f32 1.0, %v2516
  %v2518 = vrcp.pop %v2404
  %v2519 = vmul.f32 1.0, %v2518
  %v2520 = vrcp.pop %v2405
  %v2521 = vmul.f32 1.0, %v2520
  %v2522 = vrcp.pop %v2406
  %v2523 = vmul.f32 1.0, %v2522
  %v2524 = vrcp.pop %v2407
  %v2525 = vmul.f32 1.0, %v2524
  %v2526 = vrcp.pop %v2408
  %v2527 = vmul.f32 1.0, %v2526
  %v2528 = vrcp.pop %v2409
  %v2529 = vmul.f32 1.0, %v2528
  %v2530 = vrcp.pop %v2410
  %v2531 = vmul.f32 1.0, %v2530
  %v2532 = vrcp.pop %v2411
  %v2533 = vmul.f32 1.0, %v2532
  %v2534 = vrcp.pop %v2412
  %v2535 = vmul.f32 1.0, %v2534
  %v2536 = vrcp.pop %v2413
  %v2537 = vmul.f32 1.0, %v2536
  %v2538 = vrcp.pop %v2414
  %v2539 = vmul.f32 1.0, %v2538
  %v2540 = vrcp.pop %v2415
  %v2541 = vmul.f32 1.0, %v2540
  %v2542 = vrcp.pop %v2416
  %v2543 = vmul.f32 1.0, %v2542
  %v2544 = vrcp.pop %v2417
  %v2545 = vmul.f32 1.0, %v2544
  %vm2546 = vcmask 7168
  %2547 = vst.msk [vmem:[%s9] sm:$0xff] %vm2546, %v2419
  %2548 = vst.msk [vmem:[%s9 + $0x8] sm:$0xff] %vm2546, %v2421
  %2549 = vst.msk [vmem:[%s9 + $0x10] sm:$0xff] %vm2546, %v2423
  %2550 = vst.msk [vmem:[%s9 + $0x18] sm:$0xff] %vm2546, %v2425
  %2551 = vst.msk [vmem:[%s9 + $0x20] sm:$0xff] %vm2546, %v2427
  %2552 = vst.msk [vmem:[%s9 + $0x28] sm:$0xff] %vm2546, %v2429
  %2553 = vst.msk [vmem:[%s9 + $0x30] sm:$0xff] %vm2546, %v2431
  %2554 = vst.msk [vmem:[%s9 + $0x38] sm:$0xff] %vm2546, %v2433
  %2555 = vst.msk [vmem:[%s9 + $0x40] sm:$0xff] %vm2546, %v2435
  %2556 = vst.msk [vmem:[%s9 + $0x48] sm:$0xff] %vm2546, %v2437
  %2557 = vst.msk [vmem:[%s9 + $0x50] sm:$0xff] %vm2546, %v2439
  %2558 = vst.msk [vmem:[%s9 + $0x58] sm:$0xff] %vm2546, %v2441
  %2559 = vst.msk [vmem:[%s9 + $0x60] sm:$0xff] %vm2546, %v2443
  %2560 = vst.msk [vmem:[%s9 + $0x68] sm:$0xff] %vm2546, %v2445
  %2561 = vst.msk [vmem:[%s9 + $0x70] sm:$0xff] %vm2546, %v2447
  %2562 = vst.msk [vmem:[%s9 + $0x78] sm:$0xff] %vm2546, %v2449
  %2563 = vst.msk [vmem:[%s9 + $0x80] sm:$0xff] %vm2546, %v2451
  %2564 = vst.msk [vmem:[%s9 + $0x88] sm:$0xff] %vm2546, %v2453
  %2565 = vst.msk [vmem:[%s9 + $0x90] sm:$0xff] %vm2546, %v2455
  %2566 = vst.msk [vmem:[%s9 + $0x98] sm:$0xff] %vm2546, %v2457
  %2567 = vst.msk [vmem:[%s9 + $0xa0] sm:$0xff] %vm2546, %v2459
  %2568 = vst.msk [vmem:[%s9 + $0xa8] sm:$0xff] %vm2546, %v2461
  %2569 = vst.msk [vmem:[%s9 + $0xb0] sm:$0xff] %vm2546, %v2463
  %2570 = vst.msk [vmem:[%s9 + $0xb8] sm:$0xff] %vm2546, %v2465
  %2571 = vst.msk [vmem:[%s9 + $0xc0] sm:$0xff] %vm2546, %v2467
  %2572 = vst.msk [vmem:[%s9 + $0xc8] sm:$0xff] %vm2546, %v2469
  %2573 = vst.msk [vmem:[%s9 + $0xd0] sm:$0xff] %vm2546, %v2471
  %2574 = vst.msk [vmem:[%s9 + $0xd8] sm:$0xff] %vm2546, %v2473
  %2575 = vst.msk [vmem:[%s9 + $0xe0] sm:$0xff] %vm2546, %v2475
  %2576 = vst.msk [vmem:[%s9 + $0xe8] sm:$0xff] %vm2546, %v2477
  %2577 = vst.msk [vmem:[%s9 + $0xf0] sm:$0xff] %vm2546, %v2479
  %2578 = vst.msk [vmem:[%s9 + $0xf8] sm:$0xff] %vm2546, %v2481
  %2579 = vst.msk [vmem:[%s9 + $0x100] sm:$0xff] %vm2546, %v2483
  %2580 = vst.msk [vmem:[%s9 + $0x108] sm:$0xff] %vm2546, %v2485
  %2581 = vst.msk [vmem:[%s9 + $0x110] sm:$0xff] %vm2546, %v2487
  %2582 = vst.msk [vmem:[%s9 + $0x118] sm:$0xff] %vm2546, %v2489
  %2583 = vst.msk [vmem:[%s9 + $0x120] sm:$0xff] %vm2546, %v2491
  %2584 = vst.msk [vmem:[%s9 + $0x128] sm:$0xff] %vm2546, %v2493
  %2585 = vst.msk [vmem:[%s9 + $0x130] sm:$0xff] %vm2546, %v2495
  %2586 = vst.msk [vmem:[%s9 + $0x138] sm:$0xff] %vm2546, %v2497
  %2587 = vst.msk [vmem:[%s9 + $0x140] sm:$0xff] %vm2546, %v2499
  %2588 = vst.msk [vmem:[%s9 + $0x148] sm:$0xff] %vm2546, %v2501
  %2589 = vst.msk [vmem:[%s9 + $0x150] sm:$0xff] %vm2546, %v2503
  %2590 = vst.msk [vmem:[%s9 + $0x158] sm:$0xff] %vm2546, %v2505
  %2591 = vst.msk [vmem:[%s9 + $0x160] sm:$0xff] %vm2546, %v2507
  %2592 = vst.msk [vmem:[%s9 + $0x168] sm:$0xff] %vm2546, %v2509
  %2593 = vst.msk [vmem:[%s9 + $0x170] sm:$0xff] %vm2546, %v2511
  %2594 = vst.msk [vmem:[%s9 + $0x178] sm:$0xff] %vm2546, %v2513
  %2595 = vst.msk [vmem:[%s9 + $0x180] sm:$0xff] %vm2546, %v2515
  %2596 = vst.msk [vmem:[%s9 + $0x188] sm:$0xff] %vm2546, %v2517
  %2597 = vst.msk [vmem:[%s9 + $0x190] sm:$0xff] %vm2546, %v2519
  %2598 = vst.msk [vmem:[%s9 + $0x198] sm:$0xff] %vm2546, %v2521
  %2599 = vst.msk [vmem:[%s9 + $0x1a0] sm:$0xff] %vm2546, %v2523
  %2600 = vst.msk [vmem:[%s9 + $0x1a8] sm:$0xff] %vm2546, %v2525
  %2601 = vst.msk [vmem:[%s9 + $0x1b0] sm:$0xff] %vm2546, %v2527
  %2602 = vst.msk [vmem:[%s9 + $0x1b8] sm:$0xff] %vm2546, %v2529
  %2603 = vst.msk [vmem:[%s9 + $0x1c0] sm:$0xff] %vm2546, %v2531
  %2604 = vst.msk [vmem:[%s9 + $0x1c8] sm:$0xff] %vm2546, %v2533
  %2605 = vst.msk [vmem:[%s9 + $0x1d0] sm:$0xff] %vm2546, %v2535
  %2606 = vst.msk [vmem:[%s9 + $0x1d8] sm:$0xff] %vm2546, %v2537
  %2607 = vst.msk [vmem:[%s9 + $0x1e0] sm:$0xff] %vm2546, %v2539
  %2608 = vst.msk [vmem:[%s9 + $0x1e8] sm:$0xff] %vm2546, %v2541
  %2609 = vst.msk [vmem:[%s9 + $0x1f0] sm:$0xff] %vm2546, %v2543
  %2610 = vst.msk [vmem:[%s9 + $0x1f8] sm:$0xff] %vm2546, %v2545
  // Predicated region
  $region38: #{discriminator_forward.1} parent=0 // pred_check
    _
  $region39: #{discriminator_forward.1} parent=0 // pred_check_branch
    %2612 = sbr.rel (0) target = $region41
  $region40: #{discriminator_forward.1} parent=0 // pred_region
    _
  $region41: #{discriminator_forward.1} parent=0 // pred_fallthru
    _
  // Predicated region
  $region42: #{discriminator_forward.1} parent=0 // pred_check
    _
  $region43: #{discriminator_forward.1} parent=0 // pred_check_branch
    %2614 = sbr.rel (0) target = $region45
  $region44: #{discriminator_forward.1} parent=0 // pred_region
    _
  $region45: #{discriminator_forward.1} parent=0 // pred_fallthru
    _

</llo_original>
